<compile_context>
chip_gen: v6e
topology: v6e:2x2x1
jax: 0.10.0
libtpu: 0.0.40
codegen_flags: <defaults>
</compile_context>

<pallas_src>
import functools

import jax
import jax.numpy as jnp
from jax.experimental import pallas as pl
from jax.experimental.pallas import tpu as pltpu


def _fused_conv_kernel(w_ref, xm_ref, xh_ref, o_ref, *, tap_offsets, tn):
    """One output tile: o[o, q] = sum_{t, c} w[t, o, c] * x[c, q + off_t].

    w_ref : (T, O, C)  bf16  per-tap weights (T = kh*kw), resident (const map)
    xm_ref: (C, TN)    bf16  main activation tile (flat (b, row, col) lanes)
    xh_ref: (C, TH)    bf16  halo: the next TH flat columns
    o_ref : (O, TN)    f32   lane-dense output tile (o-major layout)
    """
    xw = jnp.concatenate([xm_ref[...], xh_ref[...]], axis=-1)   # (C, TN+TH)
    acc = jnp.zeros(o_ref.shape, jnp.float32)
    for t, off in enumerate(tap_offsets):                       # static unroll
        xs = xw[:, off:off + tn]                                # (C, TN)
        acc = acc + jnp.dot(w_ref[t], xs,
                            preferred_element_type=jnp.float32)
    o_ref[...] = acc


def fused_conv2d(x, weight, *, stride, padding, dilation, tile_n=2048):
    """Conv2d via the flattened-image trick.  Returns (O, B, H_out, W_out)."""
    B, C, H, W = x.shape
    O, _, kh, kw = weight.shape
    sh, sw = stride
    ph, pw = padding
    dh, dw = dilation
    Hp, Wp = H + 2 * ph, W + 2 * pw
    h_out = (Hp - dh * (kh - 1) - 1) // sh + 1
    w_out = (Wp - dw * (kw - 1) - 1) // sw + 1

    # --- cheap (1x activation) layout glue, fused by XLA ---------------------
    x_pad = jnp.pad(x, ((0, 0), (0, 0), (ph, ph), (pw, pw)))
    n_tot = B * Hp * Wp
    x_flat = jnp.transpose(x_pad, (1, 0, 2, 3)).reshape(C, n_tot)
    x_flat = x_flat.astype(jnp.bfloat16)

    # Per-tap flat-lane offsets; the "wide" conv computes every flat position
    # and the valid (b, oh, ow) ones are gathered afterwards.
    tap_offsets = tuple(ki * dh * Wp + kj * dw
                        for ki in range(kh) for kj in range(kw))
    max_off = tap_offsets[-1]
    T = kh * kw

    # Halo width: smallest multiple of 128 lanes covering the receptive-field
    # reach.  Main tile: multiple of th, capped both by tile_n and by what the
    # problem needs (so small problems -> one step, little padded waste).
    th = 128 * max(1, pl.cdiv(max_off, 128))
    tn = th * max(1, min(max(1, tile_n // th), pl.cdiv(n_tot, th)))
    num_tiles = pl.cdiv(n_tot, tn)
    n_cols = num_tiles * tn + th                    # x columns incl. halo pad
    x_flat = jnp.pad(x_flat, ((0, 0), (0, n_cols - n_tot)))

    w_taps = jnp.transpose(weight, (2, 3, 0, 1)).reshape(T, O, C)
    w_taps = w_taps.astype(jnp.bfloat16)

    flops = 2 * O * C * T * num_tiles * tn
    bytes_accessed = int(w_taps.size * 2 + x_flat.size * 2 * (1 + th / tn)
                         + O * num_tiles * tn * 4)

    y_wide = pl.pallas_call(
        functools.partial(_fused_conv_kernel, tap_offsets=tap_offsets, tn=tn),
        out_shape=jax.ShapeDtypeStruct((O, num_tiles * tn), jnp.float32),
        grid=(num_tiles,),
        in_specs=[
            pl.BlockSpec((T, O, C), lambda n: (0, 0, 0)),          # weights
            pl.BlockSpec((C, tn), lambda n: (0, n)),               # main tile
            pl.BlockSpec((C, th), lambda n: (0, (n + 1) * (tn // th))),  # halo
        ],
        out_specs=pl.BlockSpec((O, tn), lambda n: (0, n)),
        compiler_params=pltpu.CompilerParams(
            dimension_semantics=("parallel",),
            vmem_limit_bytes=64 * 1024 * 1024),
        cost_estimate=pl.CostEstimate(flops=int(flops), transcendentals=0,
                                      bytes_accessed=bytes_accessed),
    )(w_taps, x_flat, x_flat)

    # Gather valid flat positions: p = b*Hp*Wp + (oh*sh)*Wp + (ow*sw).
    y = y_wide[:, :n_tot].reshape(O, B, Hp, Wp)
    y = y[:, :, 0:(h_out - 1) * sh + 1:sh, 0:(w_out - 1) * sw + 1:sw]
    return y, h_out, w_out                              # (O, B, h_out, w_out)


class MyConv2dPallas:
    """JAX/Pallas port of the PyTorch MyConv2d module (forward only)."""

    def __init__(self, n_channels, out_channels, kernel_size,
                 dilation=1, padding=0, stride=1, key=None):
        self.kernel_size = (kernel_size, kernel_size)
        self.out_channels = out_channels
        self.n_channels = n_channels
        self.dilation = (dilation, dilation)
        self.padding = (padding, padding)
        self.stride = (stride, stride)
        if key is None:
            key = jax.random.PRNGKey(42)
        # torch module only declares the parameter shape; deterministic init.
        self.weight = jax.random.normal(
            key, (out_channels, n_channels, kernel_size, kernel_size),
            dtype=jnp.float32) * 0.1

    @functools.partial(jax.jit, static_argnums=0)
    def __call__(self, x):
        B = x.shape[0]
        O = self.out_channels
        y_obhw, h_out, w_out = fused_conv2d(
            x, self.weight, stride=self.stride, padding=self.padding,
            dilation=self.dilation)
        # Reproduce the module's quirk: per-out-channel results are stacked
        # o-major into a (O*B, h, w) buffer and then .view()-ed as (B,O,h,w).
        return y_obhw.reshape(B * O, h_out, w_out).reshape(B, O, h_out, w_out)


def _reference(x, weight, stride, padding, dilation):
    """Pure-JAX reference with the module's exact o-major view semantics.

    Inputs are rounded to bf16 to match the kernel's bf16-in / f32-accumulate
    numerics; the conv itself runs at HIGHEST (f32) precision."""
    xb = x.astype(jnp.bfloat16).astype(jnp.float32)
    wb = weight.astype(jnp.bfloat16).astype(jnp.float32)
    y = jax.lax.conv_general_dilated(
        xb, wb, window_strides=stride,
        padding=[(padding[0], padding[0]), (padding[1], padding[1])],
        rhs_dilation=dilation,
        dimension_numbers=("NCHW", "OIHW", "NCHW"),
        precision=jax.lax.Precision.HIGHEST)            # (B, O, h, w)
    B, O = x.shape[0], weight.shape[0]
    h_out, w_out = y.shape[2], y.shape[3]
    y_ob = jnp.transpose(y, (1, 0, 2, 3)).reshape(B * O, h_out, w_out)
    return y_ob.reshape(B, O, h_out, w_out)


if __name__ == "__main__":
    key = jax.random.PRNGKey(0)
    kx, kwt = jax.random.split(key)

    B, C, H, W = 2, 4, 16, 16
    out_channels, ksize, padding, stride, dilation = 8, 3, 1, 1, 1

    x = jax.random.normal(kx, (B, C, H, W), dtype=jnp.float32)
    conv = MyConv2dPallas(C, out_channels, ksize,
                          dilation=dilation, padding=padding, stride=stride,
                          key=kwt)

    out = jax.block_until_ready(conv(x))
    ref = _reference(x, conv.weight, conv.stride, conv.padding, conv.dilation)

    assert out.shape == (B, out_channels, 16, 16), out.shape
    max_err = float(jnp.max(jnp.abs(out - ref)))
    assert jnp.allclose(out, ref, atol=1e-3, rtol=1e-3), f"max abs err {max_err}"
    print("KERNEL_OK")
</pallas_src>

<mosaic_0001>
module attributes {stable_mosaic.version = 11 : i64} {
  func.func @_fused_conv_kernel(%arg0: i32, %arg1: memref<9x8x4xbf16, #tpu.memory_space<vmem>>, %arg2: memref<4x768xbf16, #tpu.memory_space<vmem>>, %arg3: memref<4x128xbf16, #tpu.memory_space<vmem>>, %arg4: memref<8x768xf32, #tpu.memory_space<vmem>>) attributes {dimension_semantics = [#tpu.dimension_semantics<parallel>], iteration_bounds = array<i64: 1>, scalar_prefetch = 0 : i64, scratch_operands = 0 : i64, tpu.core_type = #tpu.core_type<tc>, window_params = [{pipeline_mode = #tpu.pipeline_mode<synchronous>, transform_indices = @transform_0, window_bounds = array<i64: 9, 8, 4>}, {transform_indices = @transform_1, window_bounds = array<i64: 4, 768>}, {transform_indices = @transform_2, window_bounds = array<i64: 4, 128>}, {transform_indices = @transform_3, window_bounds = array<i64: 8, 768>}]} {
    %c0 = arith.constant 0 : index
    %c0_0 = arith.constant 0 : index
    %0 = vector.load %arg2[%c0, %c0_0] : memref<4x768xbf16, #tpu.memory_space<vmem>>, vector<4x768xbf16>
    %c0_1 = arith.constant 0 : index
    %c0_2 = arith.constant 0 : index
    %1 = vector.load %arg3[%c0_1, %c0_2] : memref<4x128xbf16, #tpu.memory_space<vmem>>, vector<4x128xbf16>
    %2 = tpu.concatenate %0, %1 in 1 : vector<4x768xbf16>, vector<4x128xbf16> -> vector<4x896xbf16>
    %cst = arith.constant 0.000000e+00 : f32
    %3 = vector.broadcast %cst : f32 to vector<8x768xf32>
    %4 = vector.extract_strided_slice %2 {offsets = [0, 0], sizes = [4, 768], strides = [1, 1]} : vector<4x896xbf16> to vector<4x768xbf16>
    %c0_3 = arith.constant 0 : index
    %c0_4 = arith.constant 0 : index
    %c0_5 = arith.constant 0 : index
    %5 = vector.load %arg1[%c0_3, %c0_4, %c0_5] : memref<9x8x4xbf16, #tpu.memory_space<vmem>>, vector<1x8x4xbf16>
    %6 = vector.shape_cast %5 : vector<1x8x4xbf16> to vector<8x4xbf16>
    %cst_6 = arith.constant dense<0.000000e+00> : vector<8x768xf32>
    %7 = tpu.matmul %6, %4, %cst_6 {dimension_numbers = #tpu.dot_dimension_numbers<[1], [0], [0], [1], [0, 0, 1, 1], [], []>} : vector<8x4xbf16>, vector<4x768xbf16>, vector<8x768xf32> -> vector<8x768xf32>
    %8 = arith.addf %3, %7 : vector<8x768xf32>
    %9 = vector.extract_strided_slice %2 {offsets = [0, 1], sizes = [4, 768], strides = [1, 1]} : vector<4x896xbf16> to vector<4x768xbf16>
    %c1 = arith.constant 1 : index
    %c0_7 = arith.constant 0 : index
    %c0_8 = arith.constant 0 : index
    %10 = vector.load %arg1[%c1, %c0_7, %c0_8] : memref<9x8x4xbf16, #tpu.memory_space<vmem>>, vector<1x8x4xbf16>
    %11 = vector.shape_cast %10 : vector<1x8x4xbf16> to vector<8x4xbf16>
    %cst_9 = arith.constant dense<0.000000e+00> : vector<8x768xf32>
    %12 = tpu.matmul %11, %9, %cst_9 {dimension_numbers = #tpu.dot_dimension_numbers<[1], [0], [0], [1], [0, 0, 1, 1], [], []>} : vector<8x4xbf16>, vector<4x768xbf16>, vector<8x768xf32> -> vector<8x768xf32>
    %13 = arith.addf %8, %12 : vector<8x768xf32>
    %14 = vector.extract_strided_slice %2 {offsets = [0, 2], sizes = [4, 768], strides = [1, 1]} : vector<4x896xbf16> to vector<4x768xbf16>
    %c2 = arith.constant 2 : index
    %c0_10 = arith.constant 0 : index
    %c0_11 = arith.constant 0 : index
    %15 = vector.load %arg1[%c2, %c0_10, %c0_11] : memref<9x8x4xbf16, #tpu.memory_space<vmem>>, vector<1x8x4xbf16>
    %16 = vector.shape_cast %15 : vector<1x8x4xbf16> to vector<8x4xbf16>
    %cst_12 = arith.constant dense<0.000000e+00> : vector<8x768xf32>
    %17 = tpu.matmul %16, %14, %cst_12 {dimension_numbers = #tpu.dot_dimension_numbers<[1], [0], [0], [1], [0, 0, 1, 1], [], []>} : vector<8x4xbf16>, vector<4x768xbf16>, vector<8x768xf32> -> vector<8x768xf32>
    %18 = arith.addf %13, %17 : vector<8x768xf32>
    %19 = vector.extract_strided_slice %2 {offsets = [0, 18], sizes = [4, 768], strides = [1, 1]} : vector<4x896xbf16> to vector<4x768xbf16>
    %c3 = arith.constant 3 : index
    %c0_13 = arith.constant 0 : index
    %c0_14 = arith.constant 0 : index
    %20 = vector.load %arg1[%c3, %c0_13, %c0_14] : memref<9x8x4xbf16, #tpu.memory_space<vmem>>, vector<1x8x4xbf16>
    %21 = vector.shape_cast %20 : vector<1x8x4xbf16> to vector<8x4xbf16>
    %cst_15 = arith.constant dense<0.000000e+00> : vector<8x768xf32>
    %22 = tpu.matmul %21, %19, %cst_15 {dimension_numbers = #tpu.dot_dimension_numbers<[1], [0], [0], [1], [0, 0, 1, 1], [], []>} : vector<8x4xbf16>, vector<4x768xbf16>, vector<8x768xf32> -> vector<8x768xf32>
    %23 = arith.addf %18, %22 : vector<8x768xf32>
    %24 = vector.extract_strided_slice %2 {offsets = [0, 19], sizes = [4, 768], strides = [1, 1]} : vector<4x896xbf16> to vector<4x768xbf16>
    %c4 = arith.constant 4 : index
    %c0_16 = arith.constant 0 : index
    %c0_17 = arith.constant 0 : index
    %25 = vector.load %arg1[%c4, %c0_16, %c0_17] : memref<9x8x4xbf16, #tpu.memory_space<vmem>>, vector<1x8x4xbf16>
    %26 = vector.shape_cast %25 : vector<1x8x4xbf16> to vector<8x4xbf16>
    %cst_18 = arith.constant dense<0.000000e+00> : vector<8x768xf32>
    %27 = tpu.matmul %26, %24, %cst_18 {dimension_numbers = #tpu.dot_dimension_numbers<[1], [0], [0], [1], [0, 0, 1, 1], [], []>} : vector<8x4xbf16>, vector<4x768xbf16>, vector<8x768xf32> -> vector<8x768xf32>
    %28 = arith.addf %23, %27 : vector<8x768xf32>
    %29 = vector.extract_strided_slice %2 {offsets = [0, 20], sizes = [4, 768], strides = [1, 1]} : vector<4x896xbf16> to vector<4x768xbf16>
    %c5 = arith.constant 5 : index
    %c0_19 = arith.constant 0 : index
    %c0_20 = arith.constant 0 : index
    %30 = vector.load %arg1[%c5, %c0_19, %c0_20] : memref<9x8x4xbf16, #tpu.memory_space<vmem>>, vector<1x8x4xbf16>
    %31 = vector.shape_cast %30 : vector<1x8x4xbf16> to vector<8x4xbf16>
    %cst_21 = arith.constant dense<0.000000e+00> : vector<8x768xf32>
    %32 = tpu.matmul %31, %29, %cst_21 {dimension_numbers = #tpu.dot_dimension_numbers<[1], [0], [0], [1], [0, 0, 1, 1], [], []>} : vector<8x4xbf16>, vector<4x768xbf16>, vector<8x768xf32> -> vector<8x768xf32>
    %33 = arith.addf %28, %32 : vector<8x768xf32>
    %34 = vector.extract_strided_slice %2 {offsets = [0, 36], sizes = [4, 768], strides = [1, 1]} : vector<4x896xbf16> to vector<4x768xbf16>
    %c6 = arith.constant 6 : index
    %c0_22 = arith.constant 0 : index
    %c0_23 = arith.constant 0 : index
    %35 = vector.load %arg1[%c6, %c0_22, %c0_23] : memref<9x8x4xbf16, #tpu.memory_space<vmem>>, vector<1x8x4xbf16>
    %36 = vector.shape_cast %35 : vector<1x8x4xbf16> to vector<8x4xbf16>
    %cst_24 = arith.constant dense<0.000000e+00> : vector<8x768xf32>
    %37 = tpu.matmul %36, %34, %cst_24 {dimension_numbers = #tpu.dot_dimension_numbers<[1], [0], [0], [1], [0, 0, 1, 1], [], []>} : vector<8x4xbf16>, vector<4x768xbf16>, vector<8x768xf32> -> vector<8x768xf32>
    %38 = arith.addf %33, %37 : vector<8x768xf32>
    %39 = vector.extract_strided_slice %2 {offsets = [0, 37], sizes = [4, 768], strides = [1, 1]} : vector<4x896xbf16> to vector<4x768xbf16>
    %c7 = arith.constant 7 : index
    %c0_25 = arith.constant 0 : index
    %c0_26 = arith.constant 0 : index
    %40 = vector.load %arg1[%c7, %c0_25, %c0_26] : memref<9x8x4xbf16, #tpu.memory_space<vmem>>, vector<1x8x4xbf16>
    %41 = vector.shape_cast %40 : vector<1x8x4xbf16> to vector<8x4xbf16>
    %cst_27 = arith.constant dense<0.000000e+00> : vector<8x768xf32>
    %42 = tpu.matmul %41, %39, %cst_27 {dimension_numbers = #tpu.dot_dimension_numbers<[1], [0], [0], [1], [0, 0, 1, 1], [], []>} : vector<8x4xbf16>, vector<4x768xbf16>, vector<8x768xf32> -> vector<8x768xf32>
    %43 = arith.addf %38, %42 : vector<8x768xf32>
    %44 = vector.extract_strided_slice %2 {offsets = [0, 38], sizes = [4, 768], strides = [1, 1]} : vector<4x896xbf16> to vector<4x768xbf16>
    %c8 = arith.constant 8 : index
    %c0_28 = arith.constant 0 : index
    %c0_29 = arith.constant 0 : index
    %45 = vector.load %arg1[%c8, %c0_28, %c0_29] : memref<9x8x4xbf16, #tpu.memory_space<vmem>>, vector<1x8x4xbf16>
    %46 = vector.shape_cast %45 : vector<1x8x4xbf16> to vector<8x4xbf16>
    %cst_30 = arith.constant dense<0.000000e+00> : vector<8x768xf32>
    %47 = tpu.matmul %46, %44, %cst_30 {dimension_numbers = #tpu.dot_dimension_numbers<[1], [0], [0], [1], [0, 0, 1, 1], [], []>} : vector<8x4xbf16>, vector<4x768xbf16>, vector<8x768xf32> -> vector<8x768xf32>
    %48 = arith.addf %43, %47 : vector<8x768xf32>
    %c0_31 = arith.constant 0 : index
    %c0_32 = arith.constant 0 : index
    %49 = vector.load %arg4[%c0_31, %c0_32] : memref<8x768xf32, #tpu.memory_space<vmem>>, vector<8x768xf32>
    tpu.vector_store %arg4[%c0_31, %c0_32], %48 {strides = array<i32>} : memref<8x768xf32, #tpu.memory_space<vmem>>, vector<8x768xf32>,
    return
  }
  func.func @transform_0(%arg0: i32) -> (i32, i32, i32) {
    %c0_i32 = arith.constant 0 : i32
    %c0_i32_0 = arith.constant 0 : i32
    %c0_i32_1 = arith.constant 0 : i32
    %c0_i32_2 = arith.constant 0 : i32
    return %c0_i32, %c0_i32_0, %c0_i32_1 : i32, i32, i32
  }
  func.func @transform_1(%arg0: i32) -> (i32, i32) {
    %c0_i32 = arith.constant 0 : i32
    %c0_i32_0 = arith.constant 0 : i32
    return %c0_i32, %arg0 : i32, i32
  }
  func.func @transform_2(%arg0: i32) -> (i32, i32) {
    %c1_i32 = arith.constant 1 : i32
    %0 = arith.addi %arg0, %c1_i32 : i32
    %c6_i32 = arith.constant 6 : i32
    %1 = arith.muli %0, %c6_i32 : i32
    %c0_i32 = arith.constant 0 : i32
    %c0_i32_0 = arith.constant 0 : i32
    return %c0_i32, %1 : i32, i32
  }
  func.func @transform_3(%arg0: i32) -> (i32, i32) {
    %c0_i32 = arith.constant 0 : i32
    %c0_i32_0 = arith.constant 0 : i32
    return %c0_i32, %arg0 : i32, i32
  }
}

</mosaic_0001>

<llo_original>
// kernel: a_call__.1
$region0: #{a_call__.1}
  #allocation0 [shape = 'u32[]', space=smem, size = 0x4, offset = 0x4, fixed_abs, tag = 'smem constant byte address 0x4 - core index']
  #allocation1 [shape = 'u32[144,128]{1,0:T(1,128)}', space=vmem, size = 0x12000, scoped, tag = 'internal scratch']
  %s0 = inlined_call_operand.vmem [shape: bf16[9,8,4], index: 0, kind: input, shape index: {}]
  %s1 = inlined_call_operand.vmem [shape: bf16[4,896], index: 1, kind: input, shape index: {}, may-alias: {1,2}]
  %s2 = inlined_call_operand.vmem [shape: bf16[4,896], index: 2, kind: input, shape index: {}, may-alias: {1,2}]
  %s3 = inlined_call_operand.vmem [shape: f32[8,768], index: 3, kind: output, shape index: {}]
  %s4 = sld [smem:[#allocation0]]
  $region22: #{a_call__.1} parent=0
    _
  %s6 = ssub.s32 1, %s4
  %s7 = scalar_select 0, %s6, %s4
  // Predicated region
  $region2: #{a_call__.1} parent=0 // pred_check
    _
  $region3: #{a_call__.1} parent=0 // pred_check_branch
    %9 = sbr.rel (0) target = $region5
  $region4: #{a_call__.1} parent=0 // pred_region
    _
  $region5: #{a_call__.1} parent=0 // pred_fallthru
    _
  // Predicated region
  $region6: #{a_call__.1} parent=0 // pred_check
    _
  $region7: #{a_call__.1} parent=0 // pred_check_branch
    %11 = sbr.rel (0) target = $region9
  $region8: #{a_call__.1} parent=0 // pred_region
    _
  $region9: #{a_call__.1} parent=0 // pred_fallthru
    _
  // Predicated region
  $region10: #{a_call__.1} parent=0 // pred_check
    _
  $region11: #{a_call__.1} parent=0 // pred_check_branch
    %13 = sbr.rel (0) target = $region13
  $region12: #{a_call__.1} parent=0 // pred_region
    %s14 = sadd.s32 0, 1
    %s15 = smul.u32 %s14, 6
    %p16 = scmp.lt.s32.totalorder %s15, 6
    %s17 = scalar_select %p16, %s15, 6
    %s18 = smul.addr %s17, 2
    %s19 = scalar_lea.vmem %s2, %s18
    %s20 = sadd.s32 0, 1
    %s21 = smul.u32 %s20, 6
  $region13: #{a_call__.1} parent=0 // pred_fallthru
    _
  %s22 = sadd.s32 0, 1
  %s23 = smul.u32 %s22, 6
  %p24 = scmp.lt.s32.totalorder %s23, 6
  %s25 = scalar_select %p24, %s23, 6
  %s26 = smul.addr %s25, 2
  %s27 = scalar_lea.vmem %s2, %s26
  %s28 = sadd.s32 0, 1
  %s29 = smul.u32 %s28, 6
  %p30 = scmp.lt.s32.totalorder %s29, 6
  %s31 = scalar_select %p30, %s29, 6
  %s32 = smul.addr %s31, 2
  %s33 = scalar_lea.vmem %s2, %s32
  %s34 = sadd.s32 0, 1
  %s35 = smul.u32 %s34, 6
  %v37 = vld [vmem:[%s1] sm:$0xff]
  %v38 = vld [vmem:[%s1 + $0x8] sm:$0xf]
  %v39 = vld [vmem:[%s33] sm:$0x3]
  %v42 = vcombine.high %v37, %v37
  %v44 = vunpack.c.l.s4 1983009808
  %v45 = vunpack.c.0.s8 %v44
  %v46 = vlaneseq
  %v47 = vshrl.u32 %v46, 7
  %v48 = vsub.s32 %v45, %v47
  %v49 = vrot.slane %v37, %v48
  %v51 = vunpack.c.l.s4 1983009808
  %v52 = vunpack.c.0.s8 %v51
  %v53 = vlaneseq
  %v54 = vshrl.u32 %v53, 7
  %v55 = vsub.s32 %v52, %v54
  %v56 = vrot.slane %v42, %v55
  %v57 = vcombine.high %v49, %v49
  %v58 = vcombine.high %v56, %v56
  %v60 = vunpack.c.l.s4 1983009808
  %v61 = vunpack.c.0.s8 %v60
  %v62 = vlaneseq
  %v63 = vshrl.u32 %v62, 7
  %v64 = vsub.s32 %v61, %v63
  %v65 = vrot.slane %v38, %v64
  %v66 = vcombine.high %v65, %v65
  %v67 = vld [vmem:[%s0] sm:$0xf]
  %s68 = scalar_lea.vmem %s0, 4
  %v69 = vld [vmem:[%s68] sm:$0xf]
  %71 = vrot.lane.b32.xlu0 %v49, 127
  %v72 = vpop.permute.xlu0 %71
  %73 = vrot.lane.b32.xlu0 %v57, 127
  %v74 = vpop.permute.xlu0 %73
  %75 = vrot.lane.b32.xlu0 %v56, 127
  %v76 = vpop.permute.xlu0 %75
  %77 = vrot.lane.b32.xlu0 %v58, 127
  %v78 = vpop.permute.xlu0 %77
  %79 = vrot.lane.b32.xlu0 %v65, 127
  %v80 = vpop.permute.xlu0 %79
  %81 = vrot.lane.b32.xlu0 %v66, 127
  %v82 = vpop.permute.xlu0 %81
  %83 = vrot.lane.b32.xlu0 %v39, 127
  %v84 = vpop.permute.xlu0 %83
  %vm85 = vcmask 1039360
  %v86 = vsel %vm85, %v72, %v74
  %v87 = vsel %vm85, %v74, %v76
  %v88 = vsel %vm85, %v76, %v78
  %v89 = vsel %vm85, %v78, %v80
  %v90 = vsel %vm85, %v80, %v82
  %v91 = vsel %vm85, %v82, %v84
  %vm92 = vcmask 31744
  %v94 = vsel %vm92, %v69, 0
  %vm96 = vcmask 1041408
  %v98 = vsel %vm96, %v86, 0
  %v101 = vsel %vm96, %v87, 0
  %v104 = vsel %vm96, %v88, 0
  %v107 = vsel %vm96, %v89, 0
  %v110 = vsel %vm96, %v90, 0
  %v113 = vsel %vm96, %v91, 0
  %115 = vmatprep.subr.bf16.mxu0 0
  %116 = vmatpush1.bf16.msra.mxu0 0
  %117 = vmatprep.subr.bf16.mxu0 0
  %118 = vmatpush1.bf16.msra.mxu0 0
  %119 = vmatprep.subr.bf16.mxu0 0
  %120 = vmatpush1.bf16.msra.mxu0 0
  %121 = vmatprep.subr.bf16.mxu0 0
  %122 = vmatpush1.bf16.msra.mxu0 0
  %123 = vmatprep.subr.bf16.mxu0 0
  %124 = vmatpush1.bf16.msra.mxu0 0
  %125 = vmatprep.subr.bf16.mxu0 0
  %126 = vmatpush1.bf16.msra.mxu0 0
  %127 = vmatprep.subr.bf16.mxu0 0
  %128 = vmatpush1.bf16.msra.mxu0 0
  %129 = vmatprep.subr.bf16.mxu0 %v101
  %130 = vmatpush1.bf16.msra.mxu0 %v98
  %131 = vmatprep.subr.bf16.mxu0 0
  %132 = vmatpush2.bf16.msra.mxu0 0
  %133 = vmatprep.subr.bf16.mxu0 0
  %134 = vmatpush2.bf16.msra.mxu0 0
  %135 = vmatprep.subr.bf16.mxu0 0
  %136 = vmatpush2.bf16.msra.mxu0 0
  %137 = vmatprep.subr.bf16.mxu0 0
  %138 = vmatpush2.bf16.msra.mxu0 0
  %139 = vmatprep.subr.bf16.mxu0 0
  %140 = vmatpush2.bf16.msra.mxu0 0
  %141 = vmatprep.subr.bf16.mxu0 0
  %142 = vmatpush2.bf16.msra.mxu0 0
  %143 = vmatprep.subr.bf16.mxu0 0
  %144 = vmatpush2.bf16.msra.mxu0 0
  %145 = vmatprep.subr.bf16.mxu0 0
  %146 = vmatpush2.bf16.msra.mxu0 0
  %147 = vmatprep.mubr.bf16.mxu0 0
  %148 = vmatmul.mubr.bf16.gmra.mxu0 %v94
  %v149 = vpop.f32.mrf.mxu0
  %v150 = vadd.f32 0.0, %v149
  %v151 = vpop.f32.mrf.mxu0
  %v152 = vadd.f32 0.0, %v151
  %v153 = vpop.f32.mrf.mxu0
  %v154 = vpop.f32.mrf.mxu0
  %155 = vdwg.mxu0
  %156 = vmatprep.subr.bf16.mxu0 0
  %157 = vmatpush1.bf16.msra.mxu0 0
  %158 = vmatprep.subr.bf16.mxu0 0
  %159 = vmatpush1.bf16.msra.mxu0 0
  %160 = vmatprep.subr.bf16.mxu0 0
  %161 = vmatpush1.bf16.msra.mxu0 0
  %162 = vmatprep.subr.bf16.mxu0 0
  %163 = vmatpush1.bf16.msra.mxu0 0
  %164 = vmatprep.subr.bf16.mxu0 0
  %165 = vmatpush1.bf16.msra.mxu0 0
  %166 = vmatprep.subr.bf16.mxu0 0
  %167 = vmatpush1.bf16.msra.mxu0 0
  %168 = vmatprep.subr.bf16.mxu0 0
  %169 = vmatpush1.bf16.msra.mxu0 0
  %170 = vmatprep.subr.bf16.mxu0 %v107
  %171 = vmatpush1.bf16.msra.mxu0 %v104
  %172 = vmatprep.subr.bf16.mxu0 0
  %173 = vmatpush2.bf16.msra.mxu0 0
  %174 = vmatprep.subr.bf16.mxu0 0
  %175 = vmatpush2.bf16.msra.mxu0 0
  %176 = vmatprep.subr.bf16.mxu0 0
  %177 = vmatpush2.bf16.msra.mxu0 0
  %178 = vmatprep.subr.bf16.mxu0 0
  %179 = vmatpush2.bf16.msra.mxu0 0
  %180 = vmatprep.subr.bf16.mxu0 0
  %181 = vmatpush2.bf16.msra.mxu0 0
  %182 = vmatprep.subr.bf16.mxu0 0
  %183 = vmatpush2.bf16.msra.mxu0 0
  %184 = vmatprep.subr.bf16.mxu0 0
  %185 = vmatpush2.bf16.msra.mxu0 0
  %186 = vmatprep.subr.bf16.mxu0 0
  %187 = vmatpush2.bf16.msra.mxu0 0
  %188 = vmatprep.mubr.bf16.mxu0 0
  %189 = vmatmul.mubr.bf16.gmra.mxu0 %v94
  %v190 = vpop.f32.mrf.mxu0
  %v191 = vadd.f32 0.0, %v190
  %v192 = vpop.f32.mrf.mxu0
  %v193 = vadd.f32 0.0, %v192
  %v194 = vpop.f32.mrf.mxu0
  %v195 = vpop.f32.mrf.mxu0
  %196 = vdwg.mxu0
  %197 = vmatprep.subr.bf16.mxu0 0
  %198 = vmatpush1.bf16.msra.mxu0 0
  %199 = vmatprep.subr.bf16.mxu0 0
  %200 = vmatpush1.bf16.msra.mxu0 0
  %201 = vmatprep.subr.bf16.mxu0 0
  %202 = vmatpush1.bf16.msra.mxu0 0
  %203 = vmatprep.subr.bf16.mxu0 0
  %204 = vmatpush1.bf16.msra.mxu0 0
  %205 = vmatprep.subr.bf16.mxu0 0
  %206 = vmatpush1.bf16.msra.mxu0 0
  %207 = vmatprep.subr.bf16.mxu0 0
  %208 = vmatpush1.bf16.msra.mxu0 0
  %209 = vmatprep.subr.bf16.mxu0 0
  %210 = vmatpush1.bf16.msra.mxu0 0
  %211 = vmatprep.subr.bf16.mxu0 %v113
  %212 = vmatpush1.bf16.msra.mxu0 %v110
  %213 = vmatprep.subr.bf16.mxu0 0
  %214 = vmatpush2.bf16.msra.mxu0 0
  %215 = vmatprep.subr.bf16.mxu0 0
  %216 = vmatpush2.bf16.msra.mxu0 0
  %217 = vmatprep.subr.bf16.mxu0 0
  %218 = vmatpush2.bf16.msra.mxu0 0
  %219 = vmatprep.subr.bf16.mxu0 0
  %220 = vmatpush2.bf16.msra.mxu0 0
  %221 = vmatprep.subr.bf16.mxu0 0
  %222 = vmatpush2.bf16.msra.mxu0 0
  %223 = vmatprep.subr.bf16.mxu0 0
  %224 = vmatpush2.bf16.msra.mxu0 0
  %225 = vmatprep.subr.bf16.mxu0 0
  %226 = vmatpush2.bf16.msra.mxu0 0
  %227 = vmatprep.subr.bf16.mxu0 0
  %228 = vmatpush2.bf16.msra.mxu0 0
  %229 = vmatprep.mubr.bf16.mxu0 0
  %230 = vmatmul.mubr.bf16.gmra.mxu0 %v94
  %v231 = vpop.f32.mrf.mxu0
  %v232 = vadd.f32 0.0, %v231
  %v233 = vpop.f32.mrf.mxu0
  %v234 = vadd.f32 0.0, %v233
  %v235 = vpop.f32.mrf.mxu0
  %v236 = vpop.f32.mrf.mxu0
  %237 = vdwg.mxu0
  %v239 = vsel %vm92, %v67, 0
  %v242 = vsel %vm96, %v49, 0
  %v245 = vsel %vm96, %v57, 0
  %v248 = vsel %vm96, %v56, 0
  %v251 = vsel %vm96, %v58, 0
  %v254 = vsel %vm96, %v65, 0
  %v257 = vsel %vm96, %v66, 0
  %259 = vmatprep.subr.bf16.mxu0 0
  %260 = vmatpush1.bf16.msra.mxu0 0
  %261 = vmatprep.subr.bf16.mxu0 0
  %262 = vmatpush1.bf16.msra.mxu0 0
  %263 = vmatprep.subr.bf16.mxu0 0
  %264 = vmatpush1.bf16.msra.mxu0 0
  %265 = vmatprep.subr.bf16.mxu0 0
  %266 = vmatpush1.bf16.msra.mxu0 0
  %267 = vmatprep.subr.bf16.mxu0 0
  %268 = vmatpush1.bf16.msra.mxu0 0
  %269 = vmatprep.subr.bf16.mxu0 0
  %270 = vmatpush1.bf16.msra.mxu0 0
  %271 = vmatprep.subr.bf16.mxu0 0
  %272 = vmatpush1.bf16.msra.mxu0 0
  %273 = vmatprep.subr.bf16.mxu0 %v245
  %274 = vmatpush1.bf16.msra.mxu0 %v242
  %275 = vmatprep.subr.bf16.mxu0 0
  %276 = vmatpush2.bf16.msra.mxu0 0
  %277 = vmatprep.subr.bf16.mxu0 0
  %278 = vmatpush2.bf16.msra.mxu0 0
  %279 = vmatprep.subr.bf16.mxu0 0
  %280 = vmatpush2.bf16.msra.mxu0 0
  %281 = vmatprep.subr.bf16.mxu0 0
  %282 = vmatpush2.bf16.msra.mxu0 0
  %283 = vmatprep.subr.bf16.mxu0 0
  %284 = vmatpush2.bf16.msra.mxu0 0
  %285 = vmatprep.subr.bf16.mxu0 0
  %286 = vmatpush2.bf16.msra.mxu0 0
  %287 = vmatprep.subr.bf16.mxu0 0
  %288 = vmatpush2.bf16.msra.mxu0 0
  %289 = vmatprep.subr.bf16.mxu0 0
  %290 = vmatpush2.bf16.msra.mxu0 0
  %291 = vmatprep.mubr.bf16.mxu0 0
  %292 = vmatmul.mubr.bf16.gmra.mxu0 %v239
  %v293 = vpop.f32.mrf.mxu0
  %v294 = vadd.f32 %v150, %v293
  %v295 = vpop.f32.mrf.mxu0
  %v296 = vadd.f32 %v152, %v295
  %v297 = vpop.f32.mrf.mxu0
  %v298 = vpop.f32.mrf.mxu0
  %299 = vdwg.mxu0
  %300 = vmatprep.subr.bf16.mxu0 0
  %301 = vmatpush1.bf16.msra.mxu0 0
  %302 = vmatprep.subr.bf16.mxu0 0
  %303 = vmatpush1.bf16.msra.mxu0 0
  %304 = vmatprep.subr.bf16.mxu0 0
  %305 = vmatpush1.bf16.msra.mxu0 0
  %306 = vmatprep.subr.bf16.mxu0 0
  %307 = vmatpush1.bf16.msra.mxu0 0
  %308 = vmatprep.subr.bf16.mxu0 0
  %309 = vmatpush1.bf16.msra.mxu0 0
  %310 = vmatprep.subr.bf16.mxu0 0
  %311 = vmatpush1.bf16.msra.mxu0 0
  %312 = vmatprep.subr.bf16.mxu0 0
  %313 = vmatpush1.bf16.msra.mxu0 0
  %314 = vmatprep.subr.bf16.mxu0 %v251
  %315 = vmatpush1.bf16.msra.mxu0 %v248
  %316 = vmatprep.subr.bf16.mxu0 0
  %317 = vmatpush2.bf16.msra.mxu0 0
  %318 = vmatprep.subr.bf16.mxu0 0
  %319 = vmatpush2.bf16.msra.mxu0 0
  %320 = vmatprep.subr.bf16.mxu0 0
  %321 = vmatpush2.bf16.msra.mxu0 0
  %322 = vmatprep.subr.bf16.mxu0 0
  %323 = vmatpush2.bf16.msra.mxu0 0
  %324 = vmatprep.subr.bf16.mxu0 0
  %325 = vmatpush2.bf16.msra.mxu0 0
  %326 = vmatprep.subr.bf16.mxu0 0
  %327 = vmatpush2.bf16.msra.mxu0 0
  %328 = vmatprep.subr.bf16.mxu0 0
  %329 = vmatpush2.bf16.msra.mxu0 0
  %330 = vmatprep.subr.bf16.mxu0 0
  %331 = vmatpush2.bf16.msra.mxu0 0
  %332 = vmatprep.mubr.bf16.mxu0 0
  %333 = vmatmul.mubr.bf16.gmra.mxu0 %v239
  %v334 = vpop.f32.mrf.mxu0
  %v335 = vadd.f32 %v191, %v334
  %v336 = vpop.f32.mrf.mxu0
  %v337 = vadd.f32 %v193, %v336
  %v338 = vpop.f32.mrf.mxu0
  %v339 = vpop.f32.mrf.mxu0
  %340 = vdwg.mxu0
  %341 = vmatprep.subr.bf16.mxu0 0
  %342 = vmatpush1.bf16.msra.mxu0 0
  %343 = vmatprep.subr.bf16.mxu0 0
  %344 = vmatpush1.bf16.msra.mxu0 0
  %345 = vmatprep.subr.bf16.mxu0 0
  %346 = vmatpush1.bf16.msra.mxu0 0
  %347 = vmatprep.subr.bf16.mxu0 0
  %348 = vmatpush1.bf16.msra.mxu0 0
  %349 = vmatprep.subr.bf16.mxu0 0
  %350 = vmatpush1.bf16.msra.mxu0 0
  %351 = vmatprep.subr.bf16.mxu0 0
  %352 = vmatpush1.bf16.msra.mxu0 0
  %353 = vmatprep.subr.bf16.mxu0 0
  %354 = vmatpush1.bf16.msra.mxu0 0
  %355 = vmatprep.subr.bf16.mxu0 %v257
  %356 = vmatpush1.bf16.msra.mxu0 %v254
  %357 = vmatprep.subr.bf16.mxu0 0
  %358 = vmatpush2.bf16.msra.mxu0 0
  %359 = vmatprep.subr.bf16.mxu0 0
  %360 = vmatpush2.bf16.msra.mxu0 0
  %361 = vmatprep.subr.bf16.mxu0 0
  %362 = vmatpush2.bf16.msra.mxu0 0
  %363 = vmatprep.subr.bf16.mxu0 0
  %364 = vmatpush2.bf16.msra.mxu0 0
  %365 = vmatprep.subr.bf16.mxu0 0
  %366 = vmatpush2.bf16.msra.mxu0 0
  %367 = vmatprep.subr.bf16.mxu0 0
  %368 = vmatpush2.bf16.msra.mxu0 0
  %369 = vmatprep.subr.bf16.mxu0 0
  %370 = vmatpush2.bf16.msra.mxu0 0
  %371 = vmatprep.subr.bf16.mxu0 0
  %372 = vmatpush2.bf16.msra.mxu0 0
  %373 = vmatprep.mubr.bf16.mxu0 0
  %374 = vmatmul.mubr.bf16.gmra.mxu0 %v239
  %v375 = vpop.f32.mrf.mxu0
  %v376 = vadd.f32 %v232, %v375
  %v377 = vpop.f32.mrf.mxu0
  %v378 = vadd.f32 %v234, %v377
  %v379 = vpop.f32.mrf.mxu0
  %v380 = vpop.f32.mrf.mxu0
  %381 = vdwg.mxu0
  %s382 = scalar_lea.vmem %s0, 8
  %v383 = vld [vmem:[%s382] sm:$0xf]
  %384 = vrot.lane.b32.xlu0 %v49, 126
  %v385 = vpop.permute.xlu0 %384
  %386 = vrot.lane.b32.xlu0 %v57, 126
  %v387 = vpop.permute.xlu0 %386
  %388 = vrot.lane.b32.xlu0 %v56, 126
  %v389 = vpop.permute.xlu0 %388
  %390 = vrot.lane.b32.xlu0 %v58, 126
  %v391 = vpop.permute.xlu0 %390
  %392 = vrot.lane.b32.xlu0 %v65, 126
  %v393 = vpop.permute.xlu0 %392
  %394 = vrot.lane.b32.xlu0 %v66, 126
  %v395 = vpop.permute.xlu0 %394
  %396 = vrot.lane.b32.xlu0 %v39, 126
  %v397 = vpop.permute.xlu0 %396
  %vm398 = vcmask 1031168
  %v399 = vsel %vm398, %v385, %v387
  %v400 = vsel %vm398, %v387, %v389
  %v401 = vsel %vm398, %v389, %v391
  %v402 = vsel %vm398, %v391, %v393
  %v403 = vsel %vm398, %v393, %v395
  %v404 = vsel %vm398, %v395, %v397
  %v406 = vsel %vm92, %v383, 0
  %v409 = vsel %vm96, %v399, 0
  %v412 = vsel %vm96, %v400, 0
  %v415 = vsel %vm96, %v401, 0
  %v418 = vsel %vm96, %v402, 0
  %v421 = vsel %vm96, %v403, 0
  %v424 = vsel %vm96, %v404, 0
  %426 = vmatprep.subr.bf16.mxu0 0
  %427 = vmatpush1.bf16.msra.mxu0 0
  %428 = vmatprep.subr.bf16.mxu0 0
  %429 = vmatpush1.bf16.msra.mxu0 0
  %430 = vmatprep.subr.bf16.mxu0 0
  %431 = vmatpush1.bf16.msra.mxu0 0
  %432 = vmatprep.subr.bf16.mxu0 0
  %433 = vmatpush1.bf16.msra.mxu0 0
  %434 = vmatprep.subr.bf16.mxu0 0
  %435 = vmatpush1.bf16.msra.mxu0 0
  %436 = vmatprep.subr.bf16.mxu0 0
  %437 = vmatpush1.bf16.msra.mxu0 0
  %438 = vmatprep.subr.bf16.mxu0 0
  %439 = vmatpush1.bf16.msra.mxu0 0
  %440 = vmatprep.subr.bf16.mxu0 %v412
  %441 = vmatpush1.bf16.msra.mxu0 %v409
  %442 = vmatprep.subr.bf16.mxu0 0
  %443 = vmatpush2.bf16.msra.mxu0 0
  %444 = vmatprep.subr.bf16.mxu0 0
  %445 = vmatpush2.bf16.msra.mxu0 0
  %446 = vmatprep.subr.bf16.mxu0 0
  %447 = vmatpush2.bf16.msra.mxu0 0
  %448 = vmatprep.subr.bf16.mxu0 0
  %449 = vmatpush2.bf16.msra.mxu0 0
  %450 = vmatprep.subr.bf16.mxu0 0
  %451 = vmatpush2.bf16.msra.mxu0 0
  %452 = vmatprep.subr.bf16.mxu0 0
  %453 = vmatpush2.bf16.msra.mxu0 0
  %454 = vmatprep.subr.bf16.mxu0 0
  %455 = vmatpush2.bf16.msra.mxu0 0
  %456 = vmatprep.subr.bf16.mxu0 0
  %457 = vmatpush2.bf16.msra.mxu0 0
  %458 = vmatprep.mubr.bf16.mxu0 0
  %459 = vmatmul.mubr.bf16.gmra.mxu0 %v406
  %v460 = vpop.f32.mrf.mxu0
  %v461 = vadd.f32 0.0, %v460
  %v462 = vpop.f32.mrf.mxu0
  %v463 = vadd.f32 0.0, %v462
  %v464 = vpop.f32.mrf.mxu0
  %v465 = vpop.f32.mrf.mxu0
  %466 = vdwg.mxu0
  %467 = vmatprep.subr.bf16.mxu0 0
  %468 = vmatpush1.bf16.msra.mxu0 0
  %469 = vmatprep.subr.bf16.mxu0 0
  %470 = vmatpush1.bf16.msra.mxu0 0
  %471 = vmatprep.subr.bf16.mxu0 0
  %472 = vmatpush1.bf16.msra.mxu0 0
  %473 = vmatprep.subr.bf16.mxu0 0
  %474 = vmatpush1.bf16.msra.mxu0 0
  %475 = vmatprep.subr.bf16.mxu0 0
  %476 = vmatpush1.bf16.msra.mxu0 0
  %477 = vmatprep.subr.bf16.mxu0 0
  %478 = vmatpush1.bf16.msra.mxu0 0
  %479 = vmatprep.subr.bf16.mxu0 0
  %480 = vmatpush1.bf16.msra.mxu0 0
  %481 = vmatprep.subr.bf16.mxu0 %v418
  %482 = vmatpush1.bf16.msra.mxu0 %v415
  %483 = vmatprep.subr.bf16.mxu0 0
  %484 = vmatpush2.bf16.msra.mxu0 0
  %485 = vmatprep.subr.bf16.mxu0 0
  %486 = vmatpush2.bf16.msra.mxu0 0
  %487 = vmatprep.subr.bf16.mxu0 0
  %488 = vmatpush2.bf16.msra.mxu0 0
  %489 = vmatprep.subr.bf16.mxu0 0
  %490 = vmatpush2.bf16.msra.mxu0 0
  %491 = vmatprep.subr.bf16.mxu0 0
  %492 = vmatpush2.bf16.msra.mxu0 0
  %493 = vmatprep.subr.bf16.mxu0 0
  %494 = vmatpush2.bf16.msra.mxu0 0
  %495 = vmatprep.subr.bf16.mxu0 0
  %496 = vmatpush2.bf16.msra.mxu0 0
  %497 = vmatprep.subr.bf16.mxu0 0
  %498 = vmatpush2.bf16.msra.mxu0 0
  %499 = vmatprep.mubr.bf16.mxu0 0
  %500 = vmatmul.mubr.bf16.gmra.mxu0 %v406
  %v501 = vpop.f32.mrf.mxu0
  %v502 = vadd.f32 0.0, %v501
  %v503 = vpop.f32.mrf.mxu0
  %v504 = vadd.f32 0.0, %v503
  %v505 = vpop.f32.mrf.mxu0
  %v506 = vpop.f32.mrf.mxu0
  %507 = vdwg.mxu0
  %508 = vmatprep.subr.bf16.mxu0 0
  %509 = vmatpush1.bf16.msra.mxu0 0
  %510 = vmatprep.subr.bf16.mxu0 0
  %511 = vmatpush1.bf16.msra.mxu0 0
  %512 = vmatprep.subr.bf16.mxu0 0
  %513 = vmatpush1.bf16.msra.mxu0 0
  %514 = vmatprep.subr.bf16.mxu0 0
  %515 = vmatpush1.bf16.msra.mxu0 0
  %516 = vmatprep.subr.bf16.mxu0 0
  %517 = vmatpush1.bf16.msra.mxu0 0
  %518 = vmatprep.subr.bf16.mxu0 0
  %519 = vmatpush1.bf16.msra.mxu0 0
  %520 = vmatprep.subr.bf16.mxu0 0
  %521 = vmatpush1.bf16.msra.mxu0 0
  %522 = vmatprep.subr.bf16.mxu0 %v424
  %523 = vmatpush1.bf16.msra.mxu0 %v421
  %524 = vmatprep.subr.bf16.mxu0 0
  %525 = vmatpush2.bf16.msra.mxu0 0
  %526 = vmatprep.subr.bf16.mxu0 0
  %527 = vmatpush2.bf16.msra.mxu0 0
  %528 = vmatprep.subr.bf16.mxu0 0
  %529 = vmatpush2.bf16.msra.mxu0 0
  %530 = vmatprep.subr.bf16.mxu0 0
  %531 = vmatpush2.bf16.msra.mxu0 0
  %532 = vmatprep.subr.bf16.mxu0 0
  %533 = vmatpush2.bf16.msra.mxu0 0
  %534 = vmatprep.subr.bf16.mxu0 0
  %535 = vmatpush2.bf16.msra.mxu0 0
  %536 = vmatprep.subr.bf16.mxu0 0
  %537 = vmatpush2.bf16.msra.mxu0 0
  %538 = vmatprep.subr.bf16.mxu0 0
  %539 = vmatpush2.bf16.msra.mxu0 0
  %540 = vmatprep.mubr.bf16.mxu0 0
  %541 = vmatmul.mubr.bf16.gmra.mxu0 %v406
  %v542 = vpop.f32.mrf.mxu0
  %v543 = vadd.f32 0.0, %v542
  %v544 = vpop.f32.mrf.mxu0
  %v545 = vadd.f32 0.0, %v544
  %v546 = vpop.f32.mrf.mxu0
  %v547 = vpop.f32.mrf.mxu0
  %548 = vdwg.mxu0
  %v549 = vadd.f32 %v294, %v461
  %v550 = vadd.f32 %v296, %v463
  %v551 = vadd.f32 %v335, %v502
  %v552 = vadd.f32 %v337, %v504
  %v553 = vadd.f32 %v376, %v543
  %v554 = vadd.f32 %v378, %v545
  %s555 = scalar_lea.vmem %s0, 12
  %v556 = vld [vmem:[%s555] sm:$0xf]
  %557 = vrot.lane.b32.xlu0 %v49, 110
  %v558 = vpop.permute.xlu0 %557
  %559 = vrot.lane.b32.xlu0 %v57, 110
  %v560 = vpop.permute.xlu0 %559
  %561 = vrot.lane.b32.xlu0 %v56, 110
  %v562 = vpop.permute.xlu0 %561
  %563 = vrot.lane.b32.xlu0 %v58, 110
  %v564 = vpop.permute.xlu0 %563
  %565 = vrot.lane.b32.xlu0 %v65, 110
  %v566 = vpop.permute.xlu0 %565
  %567 = vrot.lane.b32.xlu0 %v66, 110
  %v568 = vpop.permute.xlu0 %567
  %569 = vrot.lane.b32.xlu0 %v39, 110
  %v570 = vpop.permute.xlu0 %569
  %vm571 = vcmask 900096
  %v572 = vsel %vm571, %v558, %v560
  %v573 = vsel %vm571, %v560, %v562
  %v574 = vsel %vm571, %v562, %v564
  %v575 = vsel %vm571, %v564, %v566
  %v576 = vsel %vm571, %v566, %v568
  %v577 = vsel %vm571, %v568, %v570
  %v579 = vsel %vm92, %v556, 0
  %v582 = vsel %vm96, %v572, 0
  %v585 = vsel %vm96, %v573, 0
  %v588 = vsel %vm96, %v574, 0
  %v591 = vsel %vm96, %v575, 0
  %v594 = vsel %vm96, %v576, 0
  %v597 = vsel %vm96, %v577, 0
  %599 = vmatprep.subr.bf16.mxu0 0
  %600 = vmatpush1.bf16.msra.mxu0 0
  %601 = vmatprep.subr.bf16.mxu0 0
  %602 = vmatpush1.bf16.msra.mxu0 0
  %603 = vmatprep.subr.bf16.mxu0 0
  %604 = vmatpush1.bf16.msra.mxu0 0
  %605 = vmatprep.subr.bf16.mxu0 0
  %606 = vmatpush1.bf16.msra.mxu0 0
  %607 = vmatprep.subr.bf16.mxu0 0
  %608 = vmatpush1.bf16.msra.mxu0 0
  %609 = vmatprep.subr.bf16.mxu0 0
  %610 = vmatpush1.bf16.msra.mxu0 0
  %611 = vmatprep.subr.bf16.mxu0 0
  %612 = vmatpush1.bf16.msra.mxu0 0
  %613 = vmatprep.subr.bf16.mxu0 %v585
  %614 = vmatpush1.bf16.msra.mxu0 %v582
  %615 = vmatprep.subr.bf16.mxu0 0
  %616 = vmatpush2.bf16.msra.mxu0 0
  %617 = vmatprep.subr.bf16.mxu0 0
  %618 = vmatpush2.bf16.msra.mxu0 0
  %619 = vmatprep.subr.bf16.mxu0 0
  %620 = vmatpush2.bf16.msra.mxu0 0
  %621 = vmatprep.subr.bf16.mxu0 0
  %622 = vmatpush2.bf16.msra.mxu0 0
  %623 = vmatprep.subr.bf16.mxu0 0
  %624 = vmatpush2.bf16.msra.mxu0 0
  %625 = vmatprep.subr.bf16.mxu0 0
  %626 = vmatpush2.bf16.msra.mxu0 0
  %627 = vmatprep.subr.bf16.mxu0 0
  %628 = vmatpush2.bf16.msra.mxu0 0
  %629 = vmatprep.subr.bf16.mxu0 0
  %630 = vmatpush2.bf16.msra.mxu0 0
  %631 = vmatprep.mubr.bf16.mxu0 0
  %632 = vmatmul.mubr.bf16.gmra.mxu0 %v579
  %v633 = vpop.f32.mrf.mxu0
  %v634 = vadd.f32 0.0, %v633
  %v635 = vpop.f32.mrf.mxu0
  %v636 = vadd.f32 0.0, %v635
  %v637 = vpop.f32.mrf.mxu0
  %v638 = vpop.f32.mrf.mxu0
  %639 = vdwg.mxu0
  %640 = vmatprep.subr.bf16.mxu0 0
  %641 = vmatpush1.bf16.msra.mxu0 0
  %642 = vmatprep.subr.bf16.mxu0 0
  %643 = vmatpush1.bf16.msra.mxu0 0
  %644 = vmatprep.subr.bf16.mxu0 0
  %645 = vmatpush1.bf16.msra.mxu0 0
  %646 = vmatprep.subr.bf16.mxu0 0
  %647 = vmatpush1.bf16.msra.mxu0 0
  %648 = vmatprep.subr.bf16.mxu0 0
  %649 = vmatpush1.bf16.msra.mxu0 0
  %650 = vmatprep.subr.bf16.mxu0 0
  %651 = vmatpush1.bf16.msra.mxu0 0
  %652 = vmatprep.subr.bf16.mxu0 0
  %653 = vmatpush1.bf16.msra.mxu0 0
  %654 = vmatprep.subr.bf16.mxu0 %v591
  %655 = vmatpush1.bf16.msra.mxu0 %v588
  %656 = vmatprep.subr.bf16.mxu0 0
  %657 = vmatpush2.bf16.msra.mxu0 0
  %658 = vmatprep.subr.bf16.mxu0 0
  %659 = vmatpush2.bf16.msra.mxu0 0
  %660 = vmatprep.subr.bf16.mxu0 0
  %661 = vmatpush2.bf16.msra.mxu0 0
  %662 = vmatprep.subr.bf16.mxu0 0
  %663 = vmatpush2.bf16.msra.mxu0 0
  %664 = vmatprep.subr.bf16.mxu0 0
  %665 = vmatpush2.bf16.msra.mxu0 0
  %666 = vmatprep.subr.bf16.mxu0 0
  %667 = vmatpush2.bf16.msra.mxu0 0
  %668 = vmatprep.subr.bf16.mxu0 0
  %669 = vmatpush2.bf16.msra.mxu0 0
  %670 = vmatprep.subr.bf16.mxu0 0
  %671 = vmatpush2.bf16.msra.mxu0 0
  %672 = vmatprep.mubr.bf16.mxu0 0
  %673 = vmatmul.mubr.bf16.gmra.mxu0 %v579
  %v674 = vpop.f32.mrf.mxu0
  %v675 = vadd.f32 0.0, %v674
  %v676 = vpop.f32.mrf.mxu0
  %v677 = vadd.f32 0.0, %v676
  %v678 = vpop.f32.mrf.mxu0
  %v679 = vpop.f32.mrf.mxu0
  %680 = vdwg.mxu0
  %681 = vmatprep.subr.bf16.mxu0 0
  %682 = vmatpush1.bf16.msra.mxu0 0
  %683 = vmatprep.subr.bf16.mxu0 0
  %684 = vmatpush1.bf16.msra.mxu0 0
  %685 = vmatprep.subr.bf16.mxu0 0
  %686 = vmatpush1.bf16.msra.mxu0 0
  %687 = vmatprep.subr.bf16.mxu0 0
  %688 = vmatpush1.bf16.msra.mxu0 0
  %689 = vmatprep.subr.bf16.mxu0 0
  %690 = vmatpush1.bf16.msra.mxu0 0
  %691 = vmatprep.subr.bf16.mxu0 0
  %692 = vmatpush1.bf16.msra.mxu0 0
  %693 = vmatprep.subr.bf16.mxu0 0
  %694 = vmatpush1.bf16.msra.mxu0 0
  %695 = vmatprep.subr.bf16.mxu0 %v597
  %696 = vmatpush1.bf16.msra.mxu0 %v594
  %697 = vmatprep.subr.bf16.mxu0 0
  %698 = vmatpush2.bf16.msra.mxu0 0
  %699 = vmatprep.subr.bf16.mxu0 0
  %700 = vmatpush2.bf16.msra.mxu0 0
  %701 = vmatprep.subr.bf16.mxu0 0
  %702 = vmatpush2.bf16.msra.mxu0 0
  %703 = vmatprep.subr.bf16.mxu0 0
  %704 = vmatpush2.bf16.msra.mxu0 0
  %705 = vmatprep.subr.bf16.mxu0 0
  %706 = vmatpush2.bf16.msra.mxu0 0
  %707 = vmatprep.subr.bf16.mxu0 0
  %708 = vmatpush2.bf16.msra.mxu0 0
  %709 = vmatprep.subr.bf16.mxu0 0
  %710 = vmatpush2.bf16.msra.mxu0 0
  %711 = vmatprep.subr.bf16.mxu0 0
  %712 = vmatpush2.bf16.msra.mxu0 0
  %713 = vmatprep.mubr.bf16.mxu0 0
  %714 = vmatmul.mubr.bf16.gmra.mxu0 %v579
  %v715 = vpop.f32.mrf.mxu0
  %v716 = vadd.f32 0.0, %v715
  %v717 = vpop.f32.mrf.mxu0
  %v718 = vadd.f32 0.0, %v717
  %v719 = vpop.f32.mrf.mxu0
  %v720 = vpop.f32.mrf.mxu0
  %721 = vdwg.mxu0
  %v722 = vadd.f32 %v549, %v634
  %v723 = vadd.f32 %v550, %v636
  %v724 = vadd.f32 %v551, %v675
  %v725 = vadd.f32 %v552, %v677
  %v726 = vadd.f32 %v553, %v716
  %v727 = vadd.f32 %v554, %v718
  %s728 = scalar_lea.vmem %s0, 16
  %v729 = vld [vmem:[%s728] sm:$0xf]
  %730 = vrot.lane.b32.xlu0 %v49, 109
  %v731 = vpop.permute.xlu0 %730
  %732 = vrot.lane.b32.xlu0 %v57, 109
  %v733 = vpop.permute.xlu0 %732
  %734 = vrot.lane.b32.xlu0 %v56, 109
  %v735 = vpop.permute.xlu0 %734
  %736 = vrot.lane.b32.xlu0 %v58, 109
  %v737 = vpop.permute.xlu0 %736
  %738 = vrot.lane.b32.xlu0 %v65, 109
  %v739 = vpop.permute.xlu0 %738
  %740 = vrot.lane.b32.xlu0 %v66, 109
  %v741 = vpop.permute.xlu0 %740
  %742 = vrot.lane.b32.xlu0 %v39, 109
  %v743 = vpop.permute.xlu0 %742
  %vm744 = vcmask 891904
  %v745 = vsel %vm744, %v731, %v733
  %v746 = vsel %vm744, %v733, %v735
  %v747 = vsel %vm744, %v735, %v737
  %v748 = vsel %vm744, %v737, %v739
  %v749 = vsel %vm744, %v739, %v741
  %v750 = vsel %vm744, %v741, %v743
  %v752 = vsel %vm92, %v729, 0
  %v755 = vsel %vm96, %v745, 0
  %v758 = vsel %vm96, %v746, 0
  %v761 = vsel %vm96, %v747, 0
  %v764 = vsel %vm96, %v748, 0
  %v767 = vsel %vm96, %v749, 0
  %v770 = vsel %vm96, %v750, 0
  %772 = vmatprep.subr.bf16.mxu0 0
  %773 = vmatpush1.bf16.msra.mxu0 0
  %774 = vmatprep.subr.bf16.mxu0 0
  %775 = vmatpush1.bf16.msra.mxu0 0
  %776 = vmatprep.subr.bf16.mxu0 0
  %777 = vmatpush1.bf16.msra.mxu0 0
  %778 = vmatprep.subr.bf16.mxu0 0
  %779 = vmatpush1.bf16.msra.mxu0 0
  %780 = vmatprep.subr.bf16.mxu0 0
  %781 = vmatpush1.bf16.msra.mxu0 0
  %782 = vmatprep.subr.bf16.mxu0 0
  %783 = vmatpush1.bf16.msra.mxu0 0
  %784 = vmatprep.subr.bf16.mxu0 0
  %785 = vmatpush1.bf16.msra.mxu0 0
  %786 = vmatprep.subr.bf16.mxu0 %v758
  %787 = vmatpush1.bf16.msra.mxu0 %v755
  %788 = vmatprep.subr.bf16.mxu0 0
  %789 = vmatpush2.bf16.msra.mxu0 0
  %790 = vmatprep.subr.bf16.mxu0 0
  %791 = vmatpush2.bf16.msra.mxu0 0
  %792 = vmatprep.subr.bf16.mxu0 0
  %793 = vmatpush2.bf16.msra.mxu0 0
  %794 = vmatprep.subr.bf16.mxu0 0
  %795 = vmatpush2.bf16.msra.mxu0 0
  %796 = vmatprep.subr.bf16.mxu0 0
  %797 = vmatpush2.bf16.msra.mxu0 0
  %798 = vmatprep.subr.bf16.mxu0 0
  %799 = vmatpush2.bf16.msra.mxu0 0
  %800 = vmatprep.subr.bf16.mxu0 0
  %801 = vmatpush2.bf16.msra.mxu0 0
  %802 = vmatprep.subr.bf16.mxu0 0
  %803 = vmatpush2.bf16.msra.mxu0 0
  %804 = vmatprep.mubr.bf16.mxu0 0
  %805 = vmatmul.mubr.bf16.gmra.mxu0 %v752
  %v806 = vpop.f32.mrf.mxu0
  %v807 = vadd.f32 0.0, %v806
  %v808 = vpop.f32.mrf.mxu0
  %v809 = vadd.f32 0.0, %v808
  %v810 = vpop.f32.mrf.mxu0
  %v811 = vpop.f32.mrf.mxu0
  %812 = vdwg.mxu0
  %813 = vmatprep.subr.bf16.mxu0 0
  %814 = vmatpush1.bf16.msra.mxu0 0
  %815 = vmatprep.subr.bf16.mxu0 0
  %816 = vmatpush1.bf16.msra.mxu0 0
  %817 = vmatprep.subr.bf16.mxu0 0
  %818 = vmatpush1.bf16.msra.mxu0 0
  %819 = vmatprep.subr.bf16.mxu0 0
  %820 = vmatpush1.bf16.msra.mxu0 0
  %821 = vmatprep.subr.bf16.mxu0 0
  %822 = vmatpush1.bf16.msra.mxu0 0
  %823 = vmatprep.subr.bf16.mxu0 0
  %824 = vmatpush1.bf16.msra.mxu0 0
  %825 = vmatprep.subr.bf16.mxu0 0
  %826 = vmatpush1.bf16.msra.mxu0 0
  %827 = vmatprep.subr.bf16.mxu0 %v764
  %828 = vmatpush1.bf16.msra.mxu0 %v761
  %829 = vmatprep.subr.bf16.mxu0 0
  %830 = vmatpush2.bf16.msra.mxu0 0
  %831 = vmatprep.subr.bf16.mxu0 0
  %832 = vmatpush2.bf16.msra.mxu0 0
  %833 = vmatprep.subr.bf16.mxu0 0
  %834 = vmatpush2.bf16.msra.mxu0 0
  %835 = vmatprep.subr.bf16.mxu0 0
  %836 = vmatpush2.bf16.msra.mxu0 0
  %837 = vmatprep.subr.bf16.mxu0 0
  %838 = vmatpush2.bf16.msra.mxu0 0
  %839 = vmatprep.subr.bf16.mxu0 0
  %840 = vmatpush2.bf16.msra.mxu0 0
  %841 = vmatprep.subr.bf16.mxu0 0
  %842 = vmatpush2.bf16.msra.mxu0 0
  %843 = vmatprep.subr.bf16.mxu0 0
  %844 = vmatpush2.bf16.msra.mxu0 0
  %845 = vmatprep.mubr.bf16.mxu0 0
  %846 = vmatmul.mubr.bf16.gmra.mxu0 %v752
  %v847 = vpop.f32.mrf.mxu0
  %v848 = vadd.f32 0.0, %v847
  %v849 = vpop.f32.mrf.mxu0
  %v850 = vadd.f32 0.0, %v849
  %v851 = vpop.f32.mrf.mxu0
  %v852 = vpop.f32.mrf.mxu0
  %853 = vdwg.mxu0
  %854 = vmatprep.subr.bf16.mxu0 0
  %855 = vmatpush1.bf16.msra.mxu0 0
  %856 = vmatprep.subr.bf16.mxu0 0
  %857 = vmatpush1.bf16.msra.mxu0 0
  %858 = vmatprep.subr.bf16.mxu0 0
  %859 = vmatpush1.bf16.msra.mxu0 0
  %860 = vmatprep.subr.bf16.mxu0 0
  %861 = vmatpush1.bf16.msra.mxu0 0
  %862 = vmatprep.subr.bf16.mxu0 0
  %863 = vmatpush1.bf16.msra.mxu0 0
  %864 = vmatprep.subr.bf16.mxu0 0
  %865 = vmatpush1.bf16.msra.mxu0 0
  %866 = vmatprep.subr.bf16.mxu0 0
  %867 = vmatpush1.bf16.msra.mxu0 0
  %868 = vmatprep.subr.bf16.mxu0 %v770
  %869 = vmatpush1.bf16.msra.mxu0 %v767
  %870 = vmatprep.subr.bf16.mxu0 0
  %871 = vmatpush2.bf16.msra.mxu0 0
  %872 = vmatprep.subr.bf16.mxu0 0
  %873 = vmatpush2.bf16.msra.mxu0 0
  %874 = vmatprep.subr.bf16.mxu0 0
  %875 = vmatpush2.bf16.msra.mxu0 0
  %876 = vmatprep.subr.bf16.mxu0 0
  %877 = vmatpush2.bf16.msra.mxu0 0
  %878 = vmatprep.subr.bf16.mxu0 0
  %879 = vmatpush2.bf16.msra.mxu0 0
  %880 = vmatprep.subr.bf16.mxu0 0
  %881 = vmatpush2.bf16.msra.mxu0 0
  %882 = vmatprep.subr.bf16.mxu0 0
  %883 = vmatpush2.bf16.msra.mxu0 0
  %884 = vmatprep.subr.bf16.mxu0 0
  %885 = vmatpush2.bf16.msra.mxu0 0
  %886 = vmatprep.mubr.bf16.mxu0 0
  %887 = vmatmul.mubr.bf16.gmra.mxu0 %v752
  %v888 = vpop.f32.mrf.mxu0
  %v889 = vadd.f32 0.0, %v888
  %v890 = vpop.f32.mrf.mxu0
  %v891 = vadd.f32 0.0, %v890
  %v892 = vpop.f32.mrf.mxu0
  %v893 = vpop.f32.mrf.mxu0
  %894 = vdwg.mxu0
  %v895 = vadd.f32 %v722, %v807
  %v896 = vadd.f32 %v723, %v809
  %v897 = vadd.f32 %v724, %v848
  %v898 = vadd.f32 %v725, %v850
  %v899 = vadd.f32 %v726, %v889
  %v900 = vadd.f32 %v727, %v891
  %s901 = scalar_lea.vmem %s0, 20
  %v902 = vld [vmem:[%s901] sm:$0xf]
  %903 = vrot.lane.b32.xlu0 %v49, 108
  %v904 = vpop.permute.xlu0 %903
  %905 = vrot.lane.b32.xlu0 %v57, 108
  %v906 = vpop.permute.xlu0 %905
  %907 = vrot.lane.b32.xlu0 %v56, 108
  %v908 = vpop.permute.xlu0 %907
  %909 = vrot.lane.b32.xlu0 %v58, 108
  %v910 = vpop.permute.xlu0 %909
  %911 = vrot.lane.b32.xlu0 %v65, 108
  %v912 = vpop.permute.xlu0 %911
  %913 = vrot.lane.b32.xlu0 %v66, 108
  %v914 = vpop.permute.xlu0 %913
  %915 = vrot.lane.b32.xlu0 %v39, 108
  %v916 = vpop.permute.xlu0 %915
  %vm917 = vcmask 883712
  %v918 = vsel %vm917, %v904, %v906
  %v919 = vsel %vm917, %v906, %v908
  %v920 = vsel %vm917, %v908, %v910
  %v921 = vsel %vm917, %v910, %v912
  %v922 = vsel %vm917, %v912, %v914
  %v923 = vsel %vm917, %v914, %v916
  %v925 = vsel %vm92, %v902, 0
  %v928 = vsel %vm96, %v918, 0
  %v931 = vsel %vm96, %v919, 0
  %v934 = vsel %vm96, %v920, 0
  %v937 = vsel %vm96, %v921, 0
  %v940 = vsel %vm96, %v922, 0
  %v943 = vsel %vm96, %v923, 0
  %945 = vmatprep.subr.bf16.mxu0 0
  %946 = vmatpush1.bf16.msra.mxu0 0
  %947 = vmatprep.subr.bf16.mxu0 0
  %948 = vmatpush1.bf16.msra.mxu0 0
  %949 = vmatprep.subr.bf16.mxu0 0
  %950 = vmatpush1.bf16.msra.mxu0 0
  %951 = vmatprep.subr.bf16.mxu0 0
  %952 = vmatpush1.bf16.msra.mxu0 0
  %953 = vmatprep.subr.bf16.mxu0 0
  %954 = vmatpush1.bf16.msra.mxu0 0
  %955 = vmatprep.subr.bf16.mxu0 0
  %956 = vmatpush1.bf16.msra.mxu0 0
  %957 = vmatprep.subr.bf16.mxu0 0
  %958 = vmatpush1.bf16.msra.mxu0 0
  %959 = vmatprep.subr.bf16.mxu0 %v931
  %960 = vmatpush1.bf16.msra.mxu0 %v928
  %961 = vmatprep.subr.bf16.mxu0 0
  %962 = vmatpush2.bf16.msra.mxu0 0
  %963 = vmatprep.subr.bf16.mxu0 0
  %964 = vmatpush2.bf16.msra.mxu0 0
  %965 = vmatprep.subr.bf16.mxu0 0
  %966 = vmatpush2.bf16.msra.mxu0 0
  %967 = vmatprep.subr.bf16.mxu0 0
  %968 = vmatpush2.bf16.msra.mxu0 0
  %969 = vmatprep.subr.bf16.mxu0 0
  %970 = vmatpush2.bf16.msra.mxu0 0
  %971 = vmatprep.subr.bf16.mxu0 0
  %972 = vmatpush2.bf16.msra.mxu0 0
  %973 = vmatprep.subr.bf16.mxu0 0
  %974 = vmatpush2.bf16.msra.mxu0 0
  %975 = vmatprep.subr.bf16.mxu0 0
  %976 = vmatpush2.bf16.msra.mxu0 0
  %977 = vmatprep.mubr.bf16.mxu0 0
  %978 = vmatmul.mubr.bf16.gmra.mxu0 %v925
  %v979 = vpop.f32.mrf.mxu0
  %v980 = vadd.f32 0.0, %v979
  %v981 = vpop.f32.mrf.mxu0
  %v982 = vadd.f32 0.0, %v981
  %v983 = vpop.f32.mrf.mxu0
  %v984 = vpop.f32.mrf.mxu0
  %985 = vdwg.mxu0
  %986 = vmatprep.subr.bf16.mxu0 0
  %987 = vmatpush1.bf16.msra.mxu0 0
  %988 = vmatprep.subr.bf16.mxu0 0
  %989 = vmatpush1.bf16.msra.mxu0 0
  %990 = vmatprep.subr.bf16.mxu0 0
  %991 = vmatpush1.bf16.msra.mxu0 0
  %992 = vmatprep.subr.bf16.mxu0 0
  %993 = vmatpush1.bf16.msra.mxu0 0
  %994 = vmatprep.subr.bf16.mxu0 0
  %995 = vmatpush1.bf16.msra.mxu0 0
  %996 = vmatprep.subr.bf16.mxu0 0
  %997 = vmatpush1.bf16.msra.mxu0 0
  %998 = vmatprep.subr.bf16.mxu0 0
  %999 = vmatpush1.bf16.msra.mxu0 0
  %1000 = vmatprep.subr.bf16.mxu0 %v937
  %1001 = vmatpush1.bf16.msra.mxu0 %v934
  %1002 = vmatprep.subr.bf16.mxu0 0
  %1003 = vmatpush2.bf16.msra.mxu0 0
  %1004 = vmatprep.subr.bf16.mxu0 0
  %1005 = vmatpush2.bf16.msra.mxu0 0
  %1006 = vmatprep.subr.bf16.mxu0 0
  %1007 = vmatpush2.bf16.msra.mxu0 0
  %1008 = vmatprep.subr.bf16.mxu0 0
  %1009 = vmatpush2.bf16.msra.mxu0 0
  %1010 = vmatprep.subr.bf16.mxu0 0
  %1011 = vmatpush2.bf16.msra.mxu0 0
  %1012 = vmatprep.subr.bf16.mxu0 0
  %1013 = vmatpush2.bf16.msra.mxu0 0
  %1014 = vmatprep.subr.bf16.mxu0 0
  %1015 = vmatpush2.bf16.msra.mxu0 0
  %1016 = vmatprep.subr.bf16.mxu0 0
  %1017 = vmatpush2.bf16.msra.mxu0 0
  %1018 = vmatprep.mubr.bf16.mxu0 0
  %1019 = vmatmul.mubr.bf16.gmra.mxu0 %v925
  %v1020 = vpop.f32.mrf.mxu0
  %v1021 = vadd.f32 0.0, %v1020
  %v1022 = vpop.f32.mrf.mxu0
  %v1023 = vadd.f32 0.0, %v1022
  %v1024 = vpop.f32.mrf.mxu0
  %v1025 = vpop.f32.mrf.mxu0
  %1026 = vdwg.mxu0
  %1027 = vmatprep.subr.bf16.mxu0 0
  %1028 = vmatpush1.bf16.msra.mxu0 0
  %1029 = vmatprep.subr.bf16.mxu0 0
  %1030 = vmatpush1.bf16.msra.mxu0 0
  %1031 = vmatprep.subr.bf16.mxu0 0
  %1032 = vmatpush1.bf16.msra.mxu0 0
  %1033 = vmatprep.subr.bf16.mxu0 0
  %1034 = vmatpush1.bf16.msra.mxu0 0
  %1035 = vmatprep.subr.bf16.mxu0 0
  %1036 = vmatpush1.bf16.msra.mxu0 0
  %1037 = vmatprep.subr.bf16.mxu0 0
  %1038 = vmatpush1.bf16.msra.mxu0 0
  %1039 = vmatprep.subr.bf16.mxu0 0
  %1040 = vmatpush1.bf16.msra.mxu0 0
  %1041 = vmatprep.subr.bf16.mxu0 %v943
  %1042 = vmatpush1.bf16.msra.mxu0 %v940
  %1043 = vmatprep.subr.bf16.mxu0 0
  %1044 = vmatpush2.bf16.msra.mxu0 0
  %1045 = vmatprep.subr.bf16.mxu0 0
  %1046 = vmatpush2.bf16.msra.mxu0 0
  %1047 = vmatprep.subr.bf16.mxu0 0
  %1048 = vmatpush2.bf16.msra.mxu0 0
  %1049 = vmatprep.subr.bf16.mxu0 0
  %1050 = vmatpush2.bf16.msra.mxu0 0
  %1051 = vmatprep.subr.bf16.mxu0 0
  %1052 = vmatpush2.bf16.msra.mxu0 0
  %1053 = vmatprep.subr.bf16.mxu0 0
  %1054 = vmatpush2.bf16.msra.mxu0 0
  %1055 = vmatprep.subr.bf16.mxu0 0
  %1056 = vmatpush2.bf16.msra.mxu0 0
  %1057 = vmatprep.subr.bf16.mxu0 0
  %1058 = vmatpush2.bf16.msra.mxu0 0
  %1059 = vmatprep.mubr.bf16.mxu0 0
  %1060 = vmatmul.mubr.bf16.gmra.mxu0 %v925
  %v1061 = vpop.f32.mrf.mxu0
  %v1062 = vadd.f32 0.0, %v1061
  %v1063 = vpop.f32.mrf.mxu0
  %v1064 = vadd.f32 0.0, %v1063
  %v1065 = vpop.f32.mrf.mxu0
  %v1066 = vpop.f32.mrf.mxu0
  %1067 = vdwg.mxu0
  %v1068 = vadd.f32 %v895, %v980
  %v1069 = vadd.f32 %v896, %v982
  %v1070 = vadd.f32 %v897, %v1021
  %v1071 = vadd.f32 %v898, %v1023
  %v1072 = vadd.f32 %v899, %v1062
  %v1073 = vadd.f32 %v900, %v1064
  %s1074 = scalar_lea.vmem %s0, 24
  %v1075 = vld [vmem:[%s1074] sm:$0xf]
  %1076 = vrot.lane.b32.xlu0 %v49, 92
  %v1077 = vpop.permute.xlu0 %1076
  %1078 = vrot.lane.b32.xlu0 %v57, 92
  %v1079 = vpop.permute.xlu0 %1078
  %1080 = vrot.lane.b32.xlu0 %v56, 92
  %v1081 = vpop.permute.xlu0 %1080
  %1082 = vrot.lane.b32.xlu0 %v58, 92
  %v1083 = vpop.permute.xlu0 %1082
  %1084 = vrot.lane.b32.xlu0 %v65, 92
  %v1085 = vpop.permute.xlu0 %1084
  %1086 = vrot.lane.b32.xlu0 %v66, 92
  %v1087 = vpop.permute.xlu0 %1086
  %1088 = vrot.lane.b32.xlu0 %v39, 92
  %v1089 = vpop.permute.xlu0 %1088
  %vm1090 = vcmask 752640
  %v1091 = vsel %vm1090, %v1077, %v1079
  %v1092 = vsel %vm1090, %v1079, %v1081
  %v1093 = vsel %vm1090, %v1081, %v1083
  %v1094 = vsel %vm1090, %v1083, %v1085
  %v1095 = vsel %vm1090, %v1085, %v1087
  %v1096 = vsel %vm1090, %v1087, %v1089
  %v1098 = vsel %vm92, %v1075, 0
  %v1101 = vsel %vm96, %v1091, 0
  %v1104 = vsel %vm96, %v1092, 0
  %v1107 = vsel %vm96, %v1093, 0
  %v1110 = vsel %vm96, %v1094, 0
  %v1113 = vsel %vm96, %v1095, 0
  %v1116 = vsel %vm96, %v1096, 0
  %1118 = vmatprep.subr.bf16.mxu0 0
  %1119 = vmatpush1.bf16.msra.mxu0 0
  %1120 = vmatprep.subr.bf16.mxu0 0
  %1121 = vmatpush1.bf16.msra.mxu0 0
  %1122 = vmatprep.subr.bf16.mxu0 0
  %1123 = vmatpush1.bf16.msra.mxu0 0
  %1124 = vmatprep.subr.bf16.mxu0 0
  %1125 = vmatpush1.bf16.msra.mxu0 0
  %1126 = vmatprep.subr.bf16.mxu0 0
  %1127 = vmatpush1.bf16.msra.mxu0 0
  %1128 = vmatprep.subr.bf16.mxu0 0
  %1129 = vmatpush1.bf16.msra.mxu0 0
  %1130 = vmatprep.subr.bf16.mxu0 0
  %1131 = vmatpush1.bf16.msra.mxu0 0
  %1132 = vmatprep.subr.bf16.mxu0 %v1104
  %1133 = vmatpush1.bf16.msra.mxu0 %v1101
  %1134 = vmatprep.subr.bf16.mxu0 0
  %1135 = vmatpush2.bf16.msra.mxu0 0
  %1136 = vmatprep.subr.bf16.mxu0 0
  %1137 = vmatpush2.bf16.msra.mxu0 0
  %1138 = vmatprep.subr.bf16.mxu0 0
  %1139 = vmatpush2.bf16.msra.mxu0 0
  %1140 = vmatprep.subr.bf16.mxu0 0
  %1141 = vmatpush2.bf16.msra.mxu0 0
  %1142 = vmatprep.subr.bf16.mxu0 0
  %1143 = vmatpush2.bf16.msra.mxu0 0
  %1144 = vmatprep.subr.bf16.mxu0 0
  %1145 = vmatpush2.bf16.msra.mxu0 0
  %1146 = vmatprep.subr.bf16.mxu0 0
  %1147 = vmatpush2.bf16.msra.mxu0 0
  %1148 = vmatprep.subr.bf16.mxu0 0
  %1149 = vmatpush2.bf16.msra.mxu0 0
  %1150 = vmatprep.mubr.bf16.mxu0 0
  %1151 = vmatmul.mubr.bf16.gmra.mxu0 %v1098
  %v1152 = vpop.f32.mrf.mxu0
  %v1153 = vadd.f32 0.0, %v1152
  %v1154 = vpop.f32.mrf.mxu0
  %v1155 = vadd.f32 0.0, %v1154
  %v1156 = vpop.f32.mrf.mxu0
  %v1157 = vpop.f32.mrf.mxu0
  %1158 = vdwg.mxu0
  %1159 = vmatprep.subr.bf16.mxu0 0
  %1160 = vmatpush1.bf16.msra.mxu0 0
  %1161 = vmatprep.subr.bf16.mxu0 0
  %1162 = vmatpush1.bf16.msra.mxu0 0
  %1163 = vmatprep.subr.bf16.mxu0 0
  %1164 = vmatpush1.bf16.msra.mxu0 0
  %1165 = vmatprep.subr.bf16.mxu0 0
  %1166 = vmatpush1.bf16.msra.mxu0 0
  %1167 = vmatprep.subr.bf16.mxu0 0
  %1168 = vmatpush1.bf16.msra.mxu0 0
  %1169 = vmatprep.subr.bf16.mxu0 0
  %1170 = vmatpush1.bf16.msra.mxu0 0
  %1171 = vmatprep.subr.bf16.mxu0 0
  %1172 = vmatpush1.bf16.msra.mxu0 0
  %1173 = vmatprep.subr.bf16.mxu0 %v1110
  %1174 = vmatpush1.bf16.msra.mxu0 %v1107
  %1175 = vmatprep.subr.bf16.mxu0 0
  %1176 = vmatpush2.bf16.msra.mxu0 0
  %1177 = vmatprep.subr.bf16.mxu0 0
  %1178 = vmatpush2.bf16.msra.mxu0 0
  %1179 = vmatprep.subr.bf16.mxu0 0
  %1180 = vmatpush2.bf16.msra.mxu0 0
  %1181 = vmatprep.subr.bf16.mxu0 0
  %1182 = vmatpush2.bf16.msra.mxu0 0
  %1183 = vmatprep.subr.bf16.mxu0 0
  %1184 = vmatpush2.bf16.msra.mxu0 0
  %1185 = vmatprep.subr.bf16.mxu0 0
  %1186 = vmatpush2.bf16.msra.mxu0 0
  %1187 = vmatprep.subr.bf16.mxu0 0
  %1188 = vmatpush2.bf16.msra.mxu0 0
  %1189 = vmatprep.subr.bf16.mxu0 0
  %1190 = vmatpush2.bf16.msra.mxu0 0
  %1191 = vmatprep.mubr.bf16.mxu0 0
  %1192 = vmatmul.mubr.bf16.gmra.mxu0 %v1098
  %v1193 = vpop.f32.mrf.mxu0
  %v1194 = vadd.f32 0.0, %v1193
  %v1195 = vpop.f32.mrf.mxu0
  %v1196 = vadd.f32 0.0, %v1195
  %v1197 = vpop.f32.mrf.mxu0
  %v1198 = vpop.f32.mrf.mxu0
  %1199 = vdwg.mxu0
  %1200 = vmatprep.subr.bf16.mxu0 0
  %1201 = vmatpush1.bf16.msra.mxu0 0
  %1202 = vmatprep.subr.bf16.mxu0 0
  %1203 = vmatpush1.bf16.msra.mxu0 0
  %1204 = vmatprep.subr.bf16.mxu0 0
  %1205 = vmatpush1.bf16.msra.mxu0 0
  %1206 = vmatprep.subr.bf16.mxu0 0
  %1207 = vmatpush1.bf16.msra.mxu0 0
  %1208 = vmatprep.subr.bf16.mxu0 0
  %1209 = vmatpush1.bf16.msra.mxu0 0
  %1210 = vmatprep.subr.bf16.mxu0 0
  %1211 = vmatpush1.bf16.msra.mxu0 0
  %1212 = vmatprep.subr.bf16.mxu0 0
  %1213 = vmatpush1.bf16.msra.mxu0 0
  %1214 = vmatprep.subr.bf16.mxu0 %v1116
  %1215 = vmatpush1.bf16.msra.mxu0 %v1113
  %1216 = vmatprep.subr.bf16.mxu0 0
  %1217 = vmatpush2.bf16.msra.mxu0 0
  %1218 = vmatprep.subr.bf16.mxu0 0
  %1219 = vmatpush2.bf16.msra.mxu0 0
  %1220 = vmatprep.subr.bf16.mxu0 0
  %1221 = vmatpush2.bf16.msra.mxu0 0
  %1222 = vmatprep.subr.bf16.mxu0 0
  %1223 = vmatpush2.bf16.msra.mxu0 0
  %1224 = vmatprep.subr.bf16.mxu0 0
  %1225 = vmatpush2.bf16.msra.mxu0 0
  %1226 = vmatprep.subr.bf16.mxu0 0
  %1227 = vmatpush2.bf16.msra.mxu0 0
  %1228 = vmatprep.subr.bf16.mxu0 0
  %1229 = vmatpush2.bf16.msra.mxu0 0
  %1230 = vmatprep.subr.bf16.mxu0 0
  %1231 = vmatpush2.bf16.msra.mxu0 0
  %1232 = vmatprep.mubr.bf16.mxu0 0
  %1233 = vmatmul.mubr.bf16.gmra.mxu0 %v1098
  %v1234 = vpop.f32.mrf.mxu0
  %v1235 = vadd.f32 0.0, %v1234
  %v1236 = vpop.f32.mrf.mxu0
  %v1237 = vadd.f32 0.0, %v1236
  %v1238 = vpop.f32.mrf.mxu0
  %v1239 = vpop.f32.mrf.mxu0
  %1240 = vdwg.mxu0
  %v1241 = vadd.f32 %v1068, %v1153
  %v1242 = vadd.f32 %v1069, %v1155
  %v1243 = vadd.f32 %v1070, %v1194
  %v1244 = vadd.f32 %v1071, %v1196
  %v1245 = vadd.f32 %v1072, %v1235
  %v1246 = vadd.f32 %v1073, %v1237
  %s1247 = scalar_lea.vmem %s0, 28
  %v1248 = vld [vmem:[%s1247] sm:$0xf]
  %1249 = vrot.lane.b32.xlu0 %v49, 91
  %v1250 = vpop.permute.xlu0 %1249
  %1251 = vrot.lane.b32.xlu0 %v57, 91
  %v1252 = vpop.permute.xlu0 %1251
  %1253 = vrot.lane.b32.xlu0 %v56, 91
  %v1254 = vpop.permute.xlu0 %1253
  %1255 = vrot.lane.b32.xlu0 %v58, 91
  %v1256 = vpop.permute.xlu0 %1255
  %1257 = vrot.lane.b32.xlu0 %v65, 91
  %v1258 = vpop.permute.xlu0 %1257
  %1259 = vrot.lane.b32.xlu0 %v66, 91
  %v1260 = vpop.permute.xlu0 %1259
  %1261 = vrot.lane.b32.xlu0 %v39, 91
  %v1262 = vpop.permute.xlu0 %1261
  %vm1263 = vcmask 744448
  %v1264 = vsel %vm1263, %v1250, %v1252
  %v1265 = vsel %vm1263, %v1252, %v1254
  %v1266 = vsel %vm1263, %v1254, %v1256
  %v1267 = vsel %vm1263, %v1256, %v1258
  %v1268 = vsel %vm1263, %v1258, %v1260
  %v1269 = vsel %vm1263, %v1260, %v1262
  %v1271 = vsel %vm92, %v1248, 0
  %v1274 = vsel %vm96, %v1264, 0
  %v1277 = vsel %vm96, %v1265, 0
  %v1280 = vsel %vm96, %v1266, 0
  %v1283 = vsel %vm96, %v1267, 0
  %v1286 = vsel %vm96, %v1268, 0
  %v1289 = vsel %vm96, %v1269, 0
  %1291 = vmatprep.subr.bf16.mxu0 0
  %1292 = vmatpush1.bf16.msra.mxu0 0
  %1293 = vmatprep.subr.bf16.mxu0 0
  %1294 = vmatpush1.bf16.msra.mxu0 0
  %1295 = vmatprep.subr.bf16.mxu0 0
  %1296 = vmatpush1.bf16.msra.mxu0 0
  %1297 = vmatprep.subr.bf16.mxu0 0
  %1298 = vmatpush1.bf16.msra.mxu0 0
  %1299 = vmatprep.subr.bf16.mxu0 0
  %1300 = vmatpush1.bf16.msra.mxu0 0
  %1301 = vmatprep.subr.bf16.mxu0 0
  %1302 = vmatpush1.bf16.msra.mxu0 0
  %1303 = vmatprep.subr.bf16.mxu0 0
  %1304 = vmatpush1.bf16.msra.mxu0 0
  %1305 = vmatprep.subr.bf16.mxu0 %v1277
  %1306 = vmatpush1.bf16.msra.mxu0 %v1274
  %1307 = vmatprep.subr.bf16.mxu0 0
  %1308 = vmatpush2.bf16.msra.mxu0 0
  %1309 = vmatprep.subr.bf16.mxu0 0
  %1310 = vmatpush2.bf16.msra.mxu0 0
  %1311 = vmatprep.subr.bf16.mxu0 0
  %1312 = vmatpush2.bf16.msra.mxu0 0
  %1313 = vmatprep.subr.bf16.mxu0 0
  %1314 = vmatpush2.bf16.msra.mxu0 0
  %1315 = vmatprep.subr.bf16.mxu0 0
  %1316 = vmatpush2.bf16.msra.mxu0 0
  %1317 = vmatprep.subr.bf16.mxu0 0
  %1318 = vmatpush2.bf16.msra.mxu0 0
  %1319 = vmatprep.subr.bf16.mxu0 0
  %1320 = vmatpush2.bf16.msra.mxu0 0
  %1321 = vmatprep.subr.bf16.mxu0 0
  %1322 = vmatpush2.bf16.msra.mxu0 0
  %1323 = vmatprep.mubr.bf16.mxu0 0
  %1324 = vmatmul.mubr.bf16.gmra.mxu0 %v1271
  %v1325 = vpop.f32.mrf.mxu0
  %v1326 = vadd.f32 0.0, %v1325
  %v1327 = vpop.f32.mrf.mxu0
  %v1328 = vadd.f32 0.0, %v1327
  %v1329 = vpop.f32.mrf.mxu0
  %v1330 = vpop.f32.mrf.mxu0
  %1331 = vdwg.mxu0
  %1332 = vmatprep.subr.bf16.mxu0 0
  %1333 = vmatpush1.bf16.msra.mxu0 0
  %1334 = vmatprep.subr.bf16.mxu0 0
  %1335 = vmatpush1.bf16.msra.mxu0 0
  %1336 = vmatprep.subr.bf16.mxu0 0
  %1337 = vmatpush1.bf16.msra.mxu0 0
  %1338 = vmatprep.subr.bf16.mxu0 0
  %1339 = vmatpush1.bf16.msra.mxu0 0
  %1340 = vmatprep.subr.bf16.mxu0 0
  %1341 = vmatpush1.bf16.msra.mxu0 0
  %1342 = vmatprep.subr.bf16.mxu0 0
  %1343 = vmatpush1.bf16.msra.mxu0 0
  %1344 = vmatprep.subr.bf16.mxu0 0
  %1345 = vmatpush1.bf16.msra.mxu0 0
  %1346 = vmatprep.subr.bf16.mxu0 %v1283
  %1347 = vmatpush1.bf16.msra.mxu0 %v1280
  %1348 = vmatprep.subr.bf16.mxu0 0
  %1349 = vmatpush2.bf16.msra.mxu0 0
  %1350 = vmatprep.subr.bf16.mxu0 0
  %1351 = vmatpush2.bf16.msra.mxu0 0
  %1352 = vmatprep.subr.bf16.mxu0 0
  %1353 = vmatpush2.bf16.msra.mxu0 0
  %1354 = vmatprep.subr.bf16.mxu0 0
  %1355 = vmatpush2.bf16.msra.mxu0 0
  %1356 = vmatprep.subr.bf16.mxu0 0
  %1357 = vmatpush2.bf16.msra.mxu0 0
  %1358 = vmatprep.subr.bf16.mxu0 0
  %1359 = vmatpush2.bf16.msra.mxu0 0
  %1360 = vmatprep.subr.bf16.mxu0 0
  %1361 = vmatpush2.bf16.msra.mxu0 0
  %1362 = vmatprep.subr.bf16.mxu0 0
  %1363 = vmatpush2.bf16.msra.mxu0 0
  %1364 = vmatprep.mubr.bf16.mxu0 0
  %1365 = vmatmul.mubr.bf16.gmra.mxu0 %v1271
  %v1366 = vpop.f32.mrf.mxu0
  %v1367 = vadd.f32 0.0, %v1366
  %v1368 = vpop.f32.mrf.mxu0
  %v1369 = vadd.f32 0.0, %v1368
  %v1370 = vpop.f32.mrf.mxu0
  %v1371 = vpop.f32.mrf.mxu0
  %1372 = vdwg.mxu0
  %1373 = vmatprep.subr.bf16.mxu0 0
  %1374 = vmatpush1.bf16.msra.mxu0 0
  %1375 = vmatprep.subr.bf16.mxu0 0
  %1376 = vmatpush1.bf16.msra.mxu0 0
  %1377 = vmatprep.subr.bf16.mxu0 0
  %1378 = vmatpush1.bf16.msra.mxu0 0
  %1379 = vmatprep.subr.bf16.mxu0 0
  %1380 = vmatpush1.bf16.msra.mxu0 0
  %1381 = vmatprep.subr.bf16.mxu0 0
  %1382 = vmatpush1.bf16.msra.mxu0 0
  %1383 = vmatprep.subr.bf16.mxu0 0
  %1384 = vmatpush1.bf16.msra.mxu0 0
  %1385 = vmatprep.subr.bf16.mxu0 0
  %1386 = vmatpush1.bf16.msra.mxu0 0
  %1387 = vmatprep.subr.bf16.mxu0 %v1289
  %1388 = vmatpush1.bf16.msra.mxu0 %v1286
  %1389 = vmatprep.subr.bf16.mxu0 0
  %1390 = vmatpush2.bf16.msra.mxu0 0
  %1391 = vmatprep.subr.bf16.mxu0 0
  %1392 = vmatpush2.bf16.msra.mxu0 0
  %1393 = vmatprep.subr.bf16.mxu0 0
  %1394 = vmatpush2.bf16.msra.mxu0 0
  %1395 = vmatprep.subr.bf16.mxu0 0
  %1396 = vmatpush2.bf16.msra.mxu0 0
  %1397 = vmatprep.subr.bf16.mxu0 0
  %1398 = vmatpush2.bf16.msra.mxu0 0
  %1399 = vmatprep.subr.bf16.mxu0 0
  %1400 = vmatpush2.bf16.msra.mxu0 0
  %1401 = vmatprep.subr.bf16.mxu0 0
  %1402 = vmatpush2.bf16.msra.mxu0 0
  %1403 = vmatprep.subr.bf16.mxu0 0
  %1404 = vmatpush2.bf16.msra.mxu0 0
  %1405 = vmatprep.mubr.bf16.mxu0 0
  %1406 = vmatmul.mubr.bf16.gmra.mxu0 %v1271
  %v1407 = vpop.f32.mrf.mxu0
  %v1408 = vadd.f32 0.0, %v1407
  %v1409 = vpop.f32.mrf.mxu0
  %v1410 = vadd.f32 0.0, %v1409
  %v1411 = vpop.f32.mrf.mxu0
  %v1412 = vpop.f32.mrf.mxu0
  %1413 = vdwg.mxu0
  %v1414 = vadd.f32 %v1241, %v1326
  %v1415 = vadd.f32 %v1242, %v1328
  %v1416 = vadd.f32 %v1243, %v1367
  %v1417 = vadd.f32 %v1244, %v1369
  %v1418 = vadd.f32 %v1245, %v1408
  %v1419 = vadd.f32 %v1246, %v1410
  %s1420 = scalar_lea.vmem %s0, 32
  %v1421 = vld [vmem:[%s1420] sm:$0xf]
  %1422 = vrot.lane.b32.xlu0 %v49, 90
  %v1423 = vpop.permute.xlu0 %1422
  %1424 = vrot.lane.b32.xlu0 %v57, 90
  %v1425 = vpop.permute.xlu0 %1424
  %1426 = vrot.lane.b32.xlu0 %v56, 90
  %v1427 = vpop.permute.xlu0 %1426
  %1428 = vrot.lane.b32.xlu0 %v58, 90
  %v1429 = vpop.permute.xlu0 %1428
  %1430 = vrot.lane.b32.xlu0 %v65, 90
  %v1431 = vpop.permute.xlu0 %1430
  %1432 = vrot.lane.b32.xlu0 %v66, 90
  %v1433 = vpop.permute.xlu0 %1432
  %1434 = vrot.lane.b32.xlu0 %v39, 90
  %v1435 = vpop.permute.xlu0 %1434
  %vm1436 = vcmask 736256
  %v1437 = vsel %vm1436, %v1423, %v1425
  %v1438 = vsel %vm1436, %v1425, %v1427
  %v1439 = vsel %vm1436, %v1427, %v1429
  %v1440 = vsel %vm1436, %v1429, %v1431
  %v1441 = vsel %vm1436, %v1431, %v1433
  %v1442 = vsel %vm1436, %v1433, %v1435
  %v1444 = vsel %vm92, %v1421, 0
  %v1447 = vsel %vm96, %v1437, 0
  %v1450 = vsel %vm96, %v1438, 0
  %v1453 = vsel %vm96, %v1439, 0
  %v1456 = vsel %vm96, %v1440, 0
  %v1459 = vsel %vm96, %v1441, 0
  %v1462 = vsel %vm96, %v1442, 0
  %1464 = vmatprep.subr.bf16.mxu0 0
  %1465 = vmatpush1.bf16.msra.mxu0 0
  %1466 = vmatprep.subr.bf16.mxu0 0
  %1467 = vmatpush1.bf16.msra.mxu0 0
  %1468 = vmatprep.subr.bf16.mxu0 0
  %1469 = vmatpush1.bf16.msra.mxu0 0
  %1470 = vmatprep.subr.bf16.mxu0 0
  %1471 = vmatpush1.bf16.msra.mxu0 0
  %1472 = vmatprep.subr.bf16.mxu0 0
  %1473 = vmatpush1.bf16.msra.mxu0 0
  %1474 = vmatprep.subr.bf16.mxu0 0
  %1475 = vmatpush1.bf16.msra.mxu0 0
  %1476 = vmatprep.subr.bf16.mxu0 0
  %1477 = vmatpush1.bf16.msra.mxu0 0
  %1478 = vmatprep.subr.bf16.mxu0 %v1450
  %1479 = vmatpush1.bf16.msra.mxu0 %v1447
  %1480 = vmatprep.subr.bf16.mxu0 0
  %1481 = vmatpush2.bf16.msra.mxu0 0
  %1482 = vmatprep.subr.bf16.mxu0 0
  %1483 = vmatpush2.bf16.msra.mxu0 0
  %1484 = vmatprep.subr.bf16.mxu0 0
  %1485 = vmatpush2.bf16.msra.mxu0 0
  %1486 = vmatprep.subr.bf16.mxu0 0
  %1487 = vmatpush2.bf16.msra.mxu0 0
  %1488 = vmatprep.subr.bf16.mxu0 0
  %1489 = vmatpush2.bf16.msra.mxu0 0
  %1490 = vmatprep.subr.bf16.mxu0 0
  %1491 = vmatpush2.bf16.msra.mxu0 0
  %1492 = vmatprep.subr.bf16.mxu0 0
  %1493 = vmatpush2.bf16.msra.mxu0 0
  %1494 = vmatprep.subr.bf16.mxu0 0
  %1495 = vmatpush2.bf16.msra.mxu0 0
  %1496 = vmatprep.mubr.bf16.mxu0 0
  %1497 = vmatmul.mubr.bf16.gmra.mxu0 %v1444
  %v1498 = vpop.f32.mrf.mxu0
  %v1499 = vadd.f32 0.0, %v1498
  %v1500 = vpop.f32.mrf.mxu0
  %v1501 = vadd.f32 0.0, %v1500
  %v1502 = vpop.f32.mrf.mxu0
  %v1503 = vpop.f32.mrf.mxu0
  %1504 = vdwg.mxu0
  %1505 = vmatprep.subr.bf16.mxu0 0
  %1506 = vmatpush1.bf16.msra.mxu0 0
  %1507 = vmatprep.subr.bf16.mxu0 0
  %1508 = vmatpush1.bf16.msra.mxu0 0
  %1509 = vmatprep.subr.bf16.mxu0 0
  %1510 = vmatpush1.bf16.msra.mxu0 0
  %1511 = vmatprep.subr.bf16.mxu0 0
  %1512 = vmatpush1.bf16.msra.mxu0 0
  %1513 = vmatprep.subr.bf16.mxu0 0
  %1514 = vmatpush1.bf16.msra.mxu0 0
  %1515 = vmatprep.subr.bf16.mxu0 0
  %1516 = vmatpush1.bf16.msra.mxu0 0
  %1517 = vmatprep.subr.bf16.mxu0 0
  %1518 = vmatpush1.bf16.msra.mxu0 0
  %1519 = vmatprep.subr.bf16.mxu0 %v1456
  %1520 = vmatpush1.bf16.msra.mxu0 %v1453
  %1521 = vmatprep.subr.bf16.mxu0 0
  %1522 = vmatpush2.bf16.msra.mxu0 0
  %1523 = vmatprep.subr.bf16.mxu0 0
  %1524 = vmatpush2.bf16.msra.mxu0 0
  %1525 = vmatprep.subr.bf16.mxu0 0
  %1526 = vmatpush2.bf16.msra.mxu0 0
  %1527 = vmatprep.subr.bf16.mxu0 0
  %1528 = vmatpush2.bf16.msra.mxu0 0
  %1529 = vmatprep.subr.bf16.mxu0 0
  %1530 = vmatpush2.bf16.msra.mxu0 0
  %1531 = vmatprep.subr.bf16.mxu0 0
  %1532 = vmatpush2.bf16.msra.mxu0 0
  %1533 = vmatprep.subr.bf16.mxu0 0
  %1534 = vmatpush2.bf16.msra.mxu0 0
  %1535 = vmatprep.subr.bf16.mxu0 0
  %1536 = vmatpush2.bf16.msra.mxu0 0
  %1537 = vmatprep.mubr.bf16.mxu0 0
  %1538 = vmatmul.mubr.bf16.gmra.mxu0 %v1444
  %v1539 = vpop.f32.mrf.mxu0
  %v1540 = vadd.f32 0.0, %v1539
  %v1541 = vpop.f32.mrf.mxu0
  %v1542 = vadd.f32 0.0, %v1541
  %v1543 = vpop.f32.mrf.mxu0
  %v1544 = vpop.f32.mrf.mxu0
  %1545 = vdwg.mxu0
  %1546 = vmatprep.subr.bf16.mxu0 0
  %1547 = vmatpush1.bf16.msra.mxu0 0
  %1548 = vmatprep.subr.bf16.mxu0 0
  %1549 = vmatpush1.bf16.msra.mxu0 0
  %1550 = vmatprep.subr.bf16.mxu0 0
  %1551 = vmatpush1.bf16.msra.mxu0 0
  %1552 = vmatprep.subr.bf16.mxu0 0
  %1553 = vmatpush1.bf16.msra.mxu0 0
  %1554 = vmatprep.subr.bf16.mxu0 0
  %1555 = vmatpush1.bf16.msra.mxu0 0
  %1556 = vmatprep.subr.bf16.mxu0 0
  %1557 = vmatpush1.bf16.msra.mxu0 0
  %1558 = vmatprep.subr.bf16.mxu0 0
  %1559 = vmatpush1.bf16.msra.mxu0 0
  %1560 = vmatprep.subr.bf16.mxu0 %v1462
  %1561 = vmatpush1.bf16.msra.mxu0 %v1459
  %1562 = vmatprep.subr.bf16.mxu0 0
  %1563 = vmatpush2.bf16.msra.mxu0 0
  %1564 = vmatprep.subr.bf16.mxu0 0
  %1565 = vmatpush2.bf16.msra.mxu0 0
  %1566 = vmatprep.subr.bf16.mxu0 0
  %1567 = vmatpush2.bf16.msra.mxu0 0
  %1568 = vmatprep.subr.bf16.mxu0 0
  %1569 = vmatpush2.bf16.msra.mxu0 0
  %1570 = vmatprep.subr.bf16.mxu0 0
  %1571 = vmatpush2.bf16.msra.mxu0 0
  %1572 = vmatprep.subr.bf16.mxu0 0
  %1573 = vmatpush2.bf16.msra.mxu0 0
  %1574 = vmatprep.subr.bf16.mxu0 0
  %1575 = vmatpush2.bf16.msra.mxu0 0
  %1576 = vmatprep.subr.bf16.mxu0 0
  %1577 = vmatpush2.bf16.msra.mxu0 0
  %1578 = vmatprep.mubr.bf16.mxu0 0
  %1579 = vmatmul.mubr.bf16.gmra.mxu0 %v1444
  %v1580 = vpop.f32.mrf.mxu0
  %v1581 = vadd.f32 0.0, %v1580
  %v1582 = vpop.f32.mrf.mxu0
  %v1583 = vadd.f32 0.0, %v1582
  %v1584 = vpop.f32.mrf.mxu0
  %v1585 = vpop.f32.mrf.mxu0
  %1586 = vdwg.mxu0
  %v1587 = vadd.f32 %v1414, %v1499
  %v1588 = vadd.f32 %v1415, %v1501
  %v1589 = vadd.f32 %v1416, %v1540
  %v1590 = vadd.f32 %v1417, %v1542
  %v1591 = vadd.f32 %v1418, %v1581
  %v1592 = vadd.f32 %v1419, %v1583
  %1593 = vst [vmem:[%s3] sm:$0xff] %v1587
  %1594 = vst [vmem:[%s3 + $0x8] sm:$0xff] %v1588
  %1595 = vst [vmem:[%s3 + $0x10] sm:$0xff] %v1589
  %1596 = vst [vmem:[%s3 + $0x18] sm:$0xff] %v1590
  %1597 = vst [vmem:[%s3 + $0x20] sm:$0xff] %v1591
  %1598 = vst [vmem:[%s3 + $0x28] sm:$0xff] %v1592
  // Predicated region
  $region14: #{a_call__.1} parent=0 // pred_check
    _
  $region15: #{a_call__.1} parent=0 // pred_check_branch
    %1600 = sbr.rel (0) target = $region17
  $region16: #{a_call__.1} parent=0 // pred_region
    _
  $region17: #{a_call__.1} parent=0 // pred_fallthru
    _
  // Predicated region
  $region18: #{a_call__.1} parent=0 // pred_check
    _
  $region19: #{a_call__.1} parent=0 // pred_check_branch
    %1602 = sbr.rel (0) target = $region21
  $region20: #{a_call__.1} parent=0 // pred_region
    _
  $region21: #{a_call__.1} parent=0 // pred_fallthru
    _

</llo_original>
